<compile_context>
chip_gen: v7x
topology: tpu7x:2x2x1
jax: 0.10.0
libtpu: 0.0.40
codegen_flags: <defaults>
</compile_context>

<pallas_src>
import jax
import jax.numpy as jnp
from jax import lax
from jax.experimental import pallas as pl
from jax.experimental.pallas import tpu as pltpu

LOC_C = 4 * 6           # 24
CLS_C = 2 * 6           # 12 (num_classes=2)
OUT_C = LOC_C + CLS_C   # 36  (both heads fused into one conv)
OUT_CP = 128            # lane-padded output channels (lane-dense stores)
GROUP_LANES = 128       # 3 taps (3*36 = 108 lanes) packed per lane group
GROUPS = 3              # one group per kernel row kh  ->  N = 3*128 = 384
NTAPS = 9


def _num_tensorcores():
    """TensorCores per device (2 on dual-TC chips, else 1).  Best-effort:
    any failure falls back to 1, which matches the single-TC v5e/v6e case."""
    try:
        info = pltpu.get_tpu_info()
        for name in ("num_cores_per_chip", "cores_per_chip", "num_tensorcores",
                     "tensorcore_count", "num_cores", "core_count"):
            v = getattr(info, name, None)
            if isinstance(v, int) and 1 <= v <= 4:
                return v
    except Exception:
        pass
    try:
        kind = jax.devices()[0].device_kind.lower()
        if "7" in kind:      # v7x-family: 2 TensorCores per chip
            return 2
    except Exception:
        pass
    return 1


def _pick_batch_tile(B, HW, num_cores):
    """Pick bt (batch elements folded per grid step).

    Priorities (per review): legal block rows; bounded per-step VMEM; fill the
    MXU (M = bt*HW >= 256); keep every TensorCore busy (grid % cores == 0);
    then the smallest M that reaches the target (else the largest available);
    finally >= 2 steps per core so the input DMA stays pipelined."""
    TARGET_M, MAX_M = 256, 2048

    def key(d):
        m = d * HW
        steps = B // d
        legal = (d == B) or (m % 8 == 0)          # (8,128) block-shape rule
        return (
            legal,
            m <= MAX_M,
            m >= TARGET_M,
            steps % num_cores == 0,
            -m if m >= TARGET_M else m,
            steps >= 2 * num_cores,
        )

    return max((d for d in range(1, B + 1) if B % d == 0), key=key)


@jax.jit
def ssd_heads(feat_nchw, w_loc, b_loc, w_cls, b_cls):
    """feat_nchw: (B, 1280, H, W) backbone features (PyTorch NCHW).
    w_loc: (24, 1280, 3, 3), b_loc: (24,); w_cls: (12, 1280, 3, 3), b_cls: (12,)
    Returns (locs (B, H*W*6, 4), classes (B, H*W*6, 2)) matching PyTorch."""
    B, C, H, W = feat_nchw.shape
    HW = H * W
    bt = _pick_batch_tile(B, HW, _num_tensorcores())
    m_blk = bt * HW
    pad_rows = W + 1                       # row padding of the accumulator

    # Fused cast + NCHW -> (rows, C) layout change: one XLA pass, bf16 write.
    feat2d = jnp.transpose(feat_nchw, (0, 2, 3, 1)).reshape(B * HW, C)
    feat2d = feat2d.astype(jnp.bfloat16)

    # Fuse both heads; pack 3 taps per 128-lane group:
    #   w_big[i, kh*128 + kw*36 + o] = weight[o, i, kh, kw]
    w = jnp.concatenate([w_loc, w_cls], axis=0)                 # (36, C, 3, 3)
    w_hwio = jnp.transpose(w, (2, 3, 1, 0))                     # (kh, kw, C, 36)
    w_grp = jnp.transpose(w_hwio, (0, 2, 1, 3)).reshape(3, C, 3 * OUT_C)
    w_grp = jnp.pad(w_grp, ((0, 0), (0, 0), (0, GROUP_LANES - 3 * OUT_C)))
    w_big = jnp.transpose(w_grp, (1, 0, 2)).reshape(C, GROUPS * GROUP_LANES)
    w_big = w_big.astype(jnp.bfloat16)                          # (C, 384) bf16

    bias = jnp.concatenate([b_loc, b_cls])
    bias = jnp.pad(bias, (0, OUT_CP - OUT_C)).reshape(1, OUT_CP)
    bias = bias.astype(jnp.float32)

    # Per-pixel tap validity for SAME padding, precomputed here so the kernel
    # needs no integer div/mod: tapmask[p, kh*3+kw] is 1.0 iff source pixel p
    # contributes tap (kh, kw) to a pixel inside the image.
    hh = jnp.arange(H)
    ww = jnp.arange(W)
    cols = []
    for kh in range(3):
        for kw in range(3):
            hv = ((hh + 1 - kh) >= 0) & ((hh + 1 - kh) < H)
            wv = ((ww + 1 - kw) >= 0) & ((ww + 1 - kw) < W)
            cols.append((hv[:, None] & wv[None, :]).reshape(HW))
    tapmask = jnp.stack(cols, axis=-1).astype(jnp.float32)      # (HW, 9)
    tapmask = jnp.tile(tapmask, (B, 1))                         # (B*HW, 9)

    def kernel(x_ref, w_ref, b_ref, mask_ref, o_ref, acc_ref):
        """x_ref   : (M, C)        bf16 pixel rows
           w_ref   : (C, 384)      bf16 packed per-tap weights
           b_ref   : (1, 128)      f32 lane-padded fused bias
           mask_ref: (M, 9)        f32 per-pixel tap validity
           o_ref   : (M, 128)      f32 conv output rows (lane-padded)
           acc_ref : (M+2*(W+1), 128) f32 row-padded accumulator scratch"""
        M = x_ref.shape[0]
        # One MXU matmul per grid step: every pixel against all 9 taps.
        y = jnp.dot(x_ref[...], w_ref[...], preferred_element_type=jnp.float32)

        # Bias-broadcast init (lanes >= 36 stay zero -> final store is clean).
        acc_ref[...] = jnp.broadcast_to(b_ref[...], acc_ref.shape)

        # Scatter each tap into its row-shifted slab of the padded
        # accumulator; the 2*(W+1) pad rows absorb shifts that fall outside
        # the tile and are discarded below (zero "same" padding).
        for kh in range(3):
            for kw in range(3):
                t = kh * 3 + kw
                lo = kh * GROUP_LANES + kw * OUT_C
                tap = y[:, lo:lo + OUT_C]                       # (M, 36)
                if not (kh == 1 and kw == 1):                   # centre tap always valid
                    tap = tap * mask_ref[:, t:t + 1]
                start = (2 - kh) * W + (2 - kw)
                acc_ref[start:start + M, :OUT_C] += tap

        o_ref[...] = acc_ref[pad_rows:pad_rows + M, :]

    out = pl.pallas_call(
        kernel,
        out_shape=jax.ShapeDtypeStruct((B * HW, OUT_CP), jnp.float32),
        grid_spec=pltpu.PrefetchScalarGridSpec(
            num_scalar_prefetch=0,
            grid=(B // bt,),
            in_specs=[
                pl.BlockSpec((m_blk, C), lambda i: (i, 0)),
                pl.BlockSpec((C, GROUPS * GROUP_LANES), lambda i: (0, 0)),
                pl.BlockSpec((1, OUT_CP), lambda i: (0, 0)),
                pl.BlockSpec((m_blk, NTAPS), lambda i: (i, 0)),
            ],
            out_specs=pl.BlockSpec((m_blk, OUT_CP), lambda i: (i, 0)),
            scratch_shapes=[
                pltpu.VMEM((m_blk + 2 * (W + 1), OUT_CP), jnp.float32)],
        ),
        compiler_params=pltpu.CompilerParams(
            dimension_semantics=("parallel",),
            vmem_limit_bytes=48 * 1024 * 1024),
    )(feat2d, w_big, bias, tapmask)

    # Drop lane padding; reshape is bit-identical to PyTorch's
    # permute(0,2,3,1).contiguous().view(...).
    locs = out[:, :LOC_C].reshape(B, HW * 6, 4)
    classes = out[:, LOC_C:OUT_C].reshape(B, HW * 6, 2)
    return locs, classes


def _reference(feat_nchw, w_loc, b_loc, w_cls, b_cls):
    """Plain-JAX reference (lax.conv, full f32) for correctness checking."""
    def conv(w, b):
        y = lax.conv_general_dilated(
            feat_nchw, w, window_strides=(1, 1), padding="SAME",
            dimension_numbers=("NCHW", "OIHW", "NCHW"),
            precision=lax.Precision.HIGHEST)
        return y + b.reshape(1, -1, 1, 1)

    B = feat_nchw.shape[0]
    locs = jnp.transpose(conv(w_loc, b_loc), (0, 2, 3, 1)).reshape(B, -1, 4)
    classes = jnp.transpose(conv(w_cls, b_cls), (0, 2, 3, 1)).reshape(B, -1, 2)
    return locs, classes


if __name__ == "__main__":
    key = jax.random.PRNGKey(0)
    k_feat, k_wl, k_bl, k_wc, k_bc = jax.random.split(key, 5)

    # MobileNetV2 backbone always emits 1280 channels; spatial map kept tiny.
    B, C, H, W = 2, 1280, 4, 4
    feat = jax.random.normal(k_feat, (B, C, H, W), jnp.float32)

    w_loc = 0.02 * jax.random.normal(k_wl, (LOC_C, C, 3, 3), jnp.float32)
    b_loc = 0.1 * jax.random.normal(k_bl, (LOC_C,), jnp.float32)
    w_cls = 0.02 * jax.random.normal(k_wc, (CLS_C, C, 3, 3), jnp.float32)
    b_cls = 0.1 * jax.random.normal(k_bc, (CLS_C,), jnp.float32)

    locs, classes = ssd_heads(feat, w_loc, b_loc, w_cls, b_cls)
    locs, classes = jax.block_until_ready((locs, classes))
    assert locs.shape == (B, H * W * 6, 4)
    assert classes.shape == (B, H * W * 6, 2)

    # Tight check: f32 reference fed the same bf16-rounded inputs the kernel
    # uses (isolates kernel math from the deliberate bf16 input cast).
    rt = lambda a: a.astype(jnp.bfloat16).astype(jnp.float32)
    ref_locs_b, ref_cls_b = _reference(rt(feat), rt(w_loc), b_loc, rt(w_cls), b_cls)
    assert jnp.allclose(locs, ref_locs_b, atol=1e-3, rtol=1e-3)
    assert jnp.allclose(classes, ref_cls_b, atol=1e-3, rtol=1e-3)

    # Loose check against the pure-f32 reference (bf16 input rounding only).
    ref_locs_f, ref_cls_f = _reference(feat, w_loc, b_loc, w_cls, b_cls)
    assert jnp.allclose(locs, ref_locs_f, atol=5e-2, rtol=5e-2)
    assert jnp.allclose(classes, ref_cls_f, atol=5e-2, rtol=5e-2)

    print("KERNEL_OK")
</pallas_src>

<mosaic_0001>
module attributes {stable_mosaic.version = 11 : i64} {
  func.func @kernel(%arg0: i32, %arg1: memref<32x1280xbf16, #tpu.memory_space<vmem>>, %arg2: memref<1280x384xbf16, #tpu.memory_space<vmem>>, %arg3: memref<1x128xf32, #tpu.memory_space<vmem>>, %arg4: memref<32x9xf32, #tpu.memory_space<vmem>>, %arg5: memref<32x128xf32, #tpu.memory_space<vmem>>, %arg6: memref<42x128xf32, #tpu.memory_space<vmem>>) attributes {dimension_semantics = [#tpu.dimension_semantics<parallel>], iteration_bounds = array<i64: 1>, scalar_prefetch = 0 : i64, scratch_operands = 1 : i64, tpu.core_type = #tpu.core_type<tc>, window_params = [{transform_indices = @transform_0, window_bounds = array<i64: 32, 1280>}, {pipeline_mode = #tpu.pipeline_mode<synchronous>, transform_indices = @transform_1, window_bounds = array<i64: 1280, 384>}, {pipeline_mode = #tpu.pipeline_mode<synchronous>, transform_indices = @transform_2, window_bounds = array<i64: 1, 128>}, {transform_indices = @transform_3, window_bounds = array<i64: 32, 9>}, {transform_indices = @transform_4, window_bounds = array<i64: 32, 128>}]} {
    %c0 = arith.constant 0 : index
    %c0_0 = arith.constant 0 : index
    %0 = vector.load %arg1[%c0, %c0_0] : memref<32x1280xbf16, #tpu.memory_space<vmem>>, vector<32x1280xbf16>
    %c0_1 = arith.constant 0 : index
    %c0_2 = arith.constant 0 : index
    %1 = vector.load %arg2[%c0_1, %c0_2] : memref<1280x384xbf16, #tpu.memory_space<vmem>>, vector<1280x384xbf16>
    %cst = arith.constant dense<0.000000e+00> : vector<32x384xf32>
    %2 = tpu.matmul %0, %1, %cst {dimension_numbers = #tpu.dot_dimension_numbers<[1], [0], [0], [1], [0, 0, 1, 1], [], []>} : vector<32x1280xbf16>, vector<1280x384xbf16>, vector<32x384xf32> -> vector<32x384xf32>
    %c0_3 = arith.constant 0 : index
    %c0_4 = arith.constant 0 : index
    %3 = vector.load %arg3[%c0_3, %c0_4] : memref<1x128xf32, #tpu.memory_space<vmem>>, vector<1x128xf32>
    %4 = vector.shape_cast %3 : vector<1x128xf32> to vector<1x128xf32>
    %5 = vector.broadcast %4 : vector<1x128xf32> to vector<42x128xf32>
    %c0_5 = arith.constant 0 : index
    %c0_6 = arith.constant 0 : index
    %6 = vector.load %arg6[%c0_5, %c0_6] : memref<42x128xf32, #tpu.memory_space<vmem>>, vector<42x128xf32>
    tpu.vector_store %arg6[%c0_5, %c0_6], %5 {strides = array<i32>} : memref<42x128xf32, #tpu.memory_space<vmem>>, vector<42x128xf32>,
    %7 = vector.extract_strided_slice %2 {offsets = [0, 0], sizes = [32, 36], strides = [1, 1]} : vector<32x384xf32> to vector<32x36xf32>
    %c0_7 = arith.constant 0 : index
    %c0_8 = arith.constant 0 : index
    %8 = vector.load %arg4[%c0_7, %c0_8] : memref<32x9xf32, #tpu.memory_space<vmem>>, vector<32x1xf32>
    %9 = vector.broadcast %8 : vector<32x1xf32> to vector<32x36xf32>
    %10 = arith.mulf %7, %9 : vector<32x36xf32>
    %c10 = arith.constant 10 : index
    %c0_9 = arith.constant 0 : index
    %11 = vector.load %arg6[%c10, %c0_9] : memref<42x128xf32, #tpu.memory_space<vmem>>, vector<32x36xf32>
    %12 = arith.addf %11, %10 : vector<32x36xf32>
    %c10_10 = arith.constant 10 : index
    %c0_11 = arith.constant 0 : index
    %13 = vector.load %arg6[%c10_10, %c0_11] : memref<42x128xf32, #tpu.memory_space<vmem>>, vector<32x36xf32>
    tpu.vector_store %arg6[%c10_10, %c0_11], %12 {strides = array<i32>} : memref<42x128xf32, #tpu.memory_space<vmem>>, vector<32x36xf32>,
    %14 = vector.extract_strided_slice %2 {offsets = [0, 36], sizes = [32, 36], strides = [1, 1]} : vector<32x384xf32> to vector<32x36xf32>
    %c0_12 = arith.constant 0 : index
    %c1 = arith.constant 1 : index
    %15 = vector.load %arg4[%c0_12, %c1] : memref<32x9xf32, #tpu.memory_space<vmem>>, vector<32x1xf32>
    %16 = vector.broadcast %15 : vector<32x1xf32> to vector<32x36xf32>
    %17 = arith.mulf %14, %16 : vector<32x36xf32>
    %c9 = arith.constant 9 : index
    %c0_13 = arith.constant 0 : index
    %18 = vector.load %arg6[%c9, %c0_13] : memref<42x128xf32, #tpu.memory_space<vmem>>, vector<32x36xf32>
    %19 = arith.addf %18, %17 : vector<32x36xf32>
    %c9_14 = arith.constant 9 : index
    %c0_15 = arith.constant 0 : index
    %20 = vector.load %arg6[%c9_14, %c0_15] : memref<42x128xf32, #tpu.memory_space<vmem>>, vector<32x36xf32>
    tpu.vector_store %arg6[%c9_14, %c0_15], %19 {strides = array<i32>} : memref<42x128xf32, #tpu.memory_space<vmem>>, vector<32x36xf32>,
    %21 = vector.extract_strided_slice %2 {offsets = [0, 72], sizes = [32, 36], strides = [1, 1]} : vector<32x384xf32> to vector<32x36xf32>
    %c0_16 = arith.constant 0 : index
    %c2 = arith.constant 2 : index
    %22 = vector.load %arg4[%c0_16, %c2] : memref<32x9xf32, #tpu.memory_space<vmem>>, vector<32x1xf32>
    %23 = vector.broadcast %22 : vector<32x1xf32> to vector<32x36xf32>
    %24 = arith.mulf %21, %23 : vector<32x36xf32>
    %c8 = arith.constant 8 : index
    %c0_17 = arith.constant 0 : index
    %25 = vector.load %arg6[%c8, %c0_17] : memref<42x128xf32, #tpu.memory_space<vmem>>, vector<32x36xf32>
    %26 = arith.addf %25, %24 : vector<32x36xf32>
    %c8_18 = arith.constant 8 : index
    %c0_19 = arith.constant 0 : index
    %27 = vector.load %arg6[%c8_18, %c0_19] : memref<42x128xf32, #tpu.memory_space<vmem>>, vector<32x36xf32>
    tpu.vector_store %arg6[%c8_18, %c0_19], %26 {strides = array<i32>} : memref<42x128xf32, #tpu.memory_space<vmem>>, vector<32x36xf32>,
    %28 = vector.extract_strided_slice %2 {offsets = [0, 128], sizes = [32, 36], strides = [1, 1]} : vector<32x384xf32> to vector<32x36xf32>
    %c0_20 = arith.constant 0 : index
    %c3 = arith.constant 3 : index
    %29 = vector.load %arg4[%c0_20, %c3] : memref<32x9xf32, #tpu.memory_space<vmem>>, vector<32x1xf32>
    %30 = vector.broadcast %29 : vector<32x1xf32> to vector<32x36xf32>
    %31 = arith.mulf %28, %30 : vector<32x36xf32>
    %c6 = arith.constant 6 : index
    %c0_21 = arith.constant 0 : index
    %32 = vector.load %arg6[%c6, %c0_21] : memref<42x128xf32, #tpu.memory_space<vmem>>, vector<32x36xf32>
    %33 = arith.addf %32, %31 : vector<32x36xf32>
    %c6_22 = arith.constant 6 : index
    %c0_23 = arith.constant 0 : index
    %34 = vector.load %arg6[%c6_22, %c0_23] : memref<42x128xf32, #tpu.memory_space<vmem>>, vector<32x36xf32>
    tpu.vector_store %arg6[%c6_22, %c0_23], %33 {strides = array<i32>} : memref<42x128xf32, #tpu.memory_space<vmem>>, vector<32x36xf32>,
    %35 = vector.extract_strided_slice %2 {offsets = [0, 164], sizes = [32, 36], strides = [1, 1]} : vector<32x384xf32> to vector<32x36xf32>
    %c5 = arith.constant 5 : index
    %c0_24 = arith.constant 0 : index
    %36 = vector.load %arg6[%c5, %c0_24] : memref<42x128xf32, #tpu.memory_space<vmem>>, vector<32x36xf32>
    %37 = arith.addf %36, %35 : vector<32x36xf32>
    %c5_25 = arith.constant 5 : index
    %c0_26 = arith.constant 0 : index
    %38 = vector.load %arg6[%c5_25, %c0_26] : memref<42x128xf32, #tpu.memory_space<vmem>>, vector<32x36xf32>
    tpu.vector_store %arg6[%c5_25, %c0_26], %37 {strides = array<i32>} : memref<42x128xf32, #tpu.memory_space<vmem>>, vector<32x36xf32>,
    %39 = vector.extract_strided_slice %2 {offsets = [0, 200], sizes = [32, 36], strides = [1, 1]} : vector<32x384xf32> to vector<32x36xf32>
    %c0_27 = arith.constant 0 : index
    %c5_28 = arith.constant 5 : index
    %40 = vector.load %arg4[%c0_27, %c5_28] : memref<32x9xf32, #tpu.memory_space<vmem>>, vector<32x1xf32>
    %41 = vector.broadcast %40 : vector<32x1xf32> to vector<32x36xf32>
    %42 = arith.mulf %39, %41 : vector<32x36xf32>
    %c4 = arith.constant 4 : index
    %c0_29 = arith.constant 0 : index
    %43 = vector.load %arg6[%c4, %c0_29] : memref<42x128xf32, #tpu.memory_space<vmem>>, vector<32x36xf32>
    %44 = arith.addf %43, %42 : vector<32x36xf32>
    %c4_30 = arith.constant 4 : index
    %c0_31 = arith.constant 0 : index
    %45 = vector.load %arg6[%c4_30, %c0_31] : memref<42x128xf32, #tpu.memory_space<vmem>>, vector<32x36xf32>
    tpu.vector_store %arg6[%c4_30, %c0_31], %44 {strides = array<i32>} : memref<42x128xf32, #tpu.memory_space<vmem>>, vector<32x36xf32>,
    %46 = vector.extract_strided_slice %2 {offsets = [0, 256], sizes = [32, 36], strides = [1, 1]} : vector<32x384xf32> to vector<32x36xf32>
    %c0_32 = arith.constant 0 : index
    %c6_33 = arith.constant 6 : index
    %47 = vector.load %arg4[%c0_32, %c6_33] : memref<32x9xf32, #tpu.memory_space<vmem>>, vector<32x1xf32>
    %48 = vector.broadcast %47 : vector<32x1xf32> to vector<32x36xf32>
    %49 = arith.mulf %46, %48 : vector<32x36xf32>
    %c2_34 = arith.constant 2 : index
    %c0_35 = arith.constant 0 : index
    %50 = vector.load %arg6[%c2_34, %c0_35] : memref<42x128xf32, #tpu.memory_space<vmem>>, vector<32x36xf32>
    %51 = arith.addf %50, %49 : vector<32x36xf32>
    %c2_36 = arith.constant 2 : index
    %c0_37 = arith.constant 0 : index
    %52 = vector.load %arg6[%c2_36, %c0_37] : memref<42x128xf32, #tpu.memory_space<vmem>>, vector<32x36xf32>
    tpu.vector_store %arg6[%c2_36, %c0_37], %51 {strides = array<i32>} : memref<42x128xf32, #tpu.memory_space<vmem>>, vector<32x36xf32>,
    %53 = vector.extract_strided_slice %2 {offsets = [0, 292], sizes = [32, 36], strides = [1, 1]} : vector<32x384xf32> to vector<32x36xf32>
    %c0_38 = arith.constant 0 : index
    %c7 = arith.constant 7 : index
    %54 = vector.load %arg4[%c0_38, %c7] : memref<32x9xf32, #tpu.memory_space<vmem>>, vector<32x1xf32>
    %55 = vector.broadcast %54 : vector<32x1xf32> to vector<32x36xf32>
    %56 = arith.mulf %53, %55 : vector<32x36xf32>
    %c1_39 = arith.constant 1 : index
    %c0_40 = arith.constant 0 : index
    %57 = vector.load %arg6[%c1_39, %c0_40] : memref<42x128xf32, #tpu.memory_space<vmem>>, vector<32x36xf32>
    %58 = arith.addf %57, %56 : vector<32x36xf32>
    %c1_41 = arith.constant 1 : index
    %c0_42 = arith.constant 0 : index
    %59 = vector.load %arg6[%c1_41, %c0_42] : memref<42x128xf32, #tpu.memory_space<vmem>>, vector<32x36xf32>
    tpu.vector_store %arg6[%c1_41, %c0_42], %58 {strides = array<i32>} : memref<42x128xf32, #tpu.memory_space<vmem>>, vector<32x36xf32>,
    %60 = vector.extract_strided_slice %2 {offsets = [0, 328], sizes = [32, 36], strides = [1, 1]} : vector<32x384xf32> to vector<32x36xf32>
    %c0_43 = arith.constant 0 : index
    %c8_44 = arith.constant 8 : index
    %61 = vector.load %arg4[%c0_43, %c8_44] : memref<32x9xf32, #tpu.memory_space<vmem>>, vector<32x1xf32>
    %62 = vector.broadcast %61 : vector<32x1xf32> to vector<32x36xf32>
    %63 = arith.mulf %60, %62 : vector<32x36xf32>
    %c0_45 = arith.constant 0 : index
    %c0_46 = arith.constant 0 : index
    %64 = vector.load %arg6[%c0_45, %c0_46] : memref<42x128xf32, #tpu.memory_space<vmem>>, vector<32x36xf32>
    %65 = arith.addf %64, %63 : vector<32x36xf32>
    %c0_47 = arith.constant 0 : index
    %c0_48 = arith.constant 0 : index
    %66 = vector.load %arg6[%c0_47, %c0_48] : memref<42x128xf32, #tpu.memory_space<vmem>>, vector<32x36xf32>
    tpu.vector_store %arg6[%c0_47, %c0_48], %65 {strides = array<i32>} : memref<42x128xf32, #tpu.memory_space<vmem>>, vector<32x36xf32>,
    %c5_49 = arith.constant 5 : index
    %c0_50 = arith.constant 0 : index
    %67 = vector.load %arg6[%c5_49, %c0_50] : memref<42x128xf32, #tpu.memory_space<vmem>>, vector<32x128xf32>
    %c0_51 = arith.constant 0 : index
    %c0_52 = arith.constant 0 : index
    %68 = vector.load %arg5[%c0_51, %c0_52] : memref<32x128xf32, #tpu.memory_space<vmem>>, vector<32x128xf32>
    tpu.vector_store %arg5[%c0_51, %c0_52], %67 {strides = array<i32>} : memref<32x128xf32, #tpu.memory_space<vmem>>, vector<32x128xf32>,
    return
  }
  func.func @transform_0(%arg0: i32) -> (i32, i32) {
    %c0_i32 = arith.constant 0 : i32
    %c0_i32_0 = arith.constant 0 : i32
    return %arg0, %c0_i32 : i32, i32
  }
  func.func @transform_1(%arg0: i32) -> (i32, i32) {
    %c0_i32 = arith.constant 0 : i32
    %c0_i32_0 = arith.constant 0 : i32
    %c0_i32_1 = arith.constant 0 : i32
    return %c0_i32, %c0_i32_0 : i32, i32
  }
  func.func @transform_2(%arg0: i32) -> (i32, i32) {
    %c0_i32 = arith.constant 0 : i32
    %c0_i32_0 = arith.constant 0 : i32
    %c0_i32_1 = arith.constant 0 : i32
    return %c0_i32, %c0_i32_0 : i32, i32
  }
  func.func @transform_3(%arg0: i32) -> (i32, i32) {
    %c0_i32 = arith.constant 0 : i32
    %c0_i32_0 = arith.constant 0 : i32
    return %arg0, %c0_i32 : i32, i32
  }
  func.func @transform_4(%arg0: i32) -> (i32, i32) {
    %c0_i32 = arith.constant 0 : i32
    %c0_i32_0 = arith.constant 0 : i32
    return %arg0, %c0_i32 : i32, i32
  }
}

</mosaic_0001>

<llo_original>
// kernel: ssd_heads.1
$region0: #{ssd_heads.1}
  #allocation0 [shape = 'u32[]', space=smem, size = 0x4, offset = 0x4, fixed_abs, tag = 'smem constant byte address 0x4 - core index']
  #allocation1 [shape = 'u32[144,128]{1,0:T(1,128)}', space=vmem, size = 0x12000, scoped, tag = 'internal scratch']
  #allocation2 [shape = 'f32[42,128]{1,0:T(8,128)}', space=vmem, size = 0x6000, scoped, tag = 'scratch operand']
  %s0 = inlined_call_operand.vmem [shape: bf16[32,1280], index: 0, kind: input, shape index: {}]
  %s1 = inlined_call_operand.vmem [shape: bf16[1280,384], index: 1, kind: input, shape index: {}]
  %s2 = inlined_call_operand.vmem [shape: f32[1,128], index: 2, kind: input, shape index: {}]
  %s3 = inlined_call_operand.vmem [shape: f32[32,9], index: 3, kind: input, shape index: {}]
  %s4 = inlined_call_operand.vmem [shape: f32[32,128], index: 4, kind: output, shape index: {}]
  %s5 = sld [smem:[#allocation0]]
  $region26: #{ssd_heads.1} parent=0
    _
  %s7 = ssub.s32 1, %s5
  %s8 = scalar_select 0, %s7, %s5
  // Predicated region
  $region2: #{ssd_heads.1} parent=0 // pred_check
    _
  $region3: #{ssd_heads.1} parent=0 // pred_check_branch
    %10 = sbr.rel (0) target = $region5
  $region4: #{ssd_heads.1} parent=0 // pred_region
    _
  $region5: #{ssd_heads.1} parent=0 // pred_fallthru
    _
  // Predicated region
  $region6: #{ssd_heads.1} parent=0 // pred_check
    _
  $region7: #{ssd_heads.1} parent=0 // pred_check_branch
    %12 = sbr.rel (0) target = $region9
  $region8: #{ssd_heads.1} parent=0 // pred_region
    _
  $region9: #{ssd_heads.1} parent=0 // pred_fallthru
    _
  // Predicated region
  $region10: #{ssd_heads.1} parent=0 // pred_check
    _
  $region11: #{ssd_heads.1} parent=0 // pred_check_branch
    %14 = sbr.rel (0) target = $region13
  $region12: #{ssd_heads.1} parent=0 // pred_region
    _
  $region13: #{ssd_heads.1} parent=0 // pred_fallthru
    _
  // Predicated region
  $region14: #{ssd_heads.1} parent=0 // pred_check
    _
  $region15: #{ssd_heads.1} parent=0 // pred_check_branch
    %16 = sbr.rel (0) target = $region17
  $region16: #{ssd_heads.1} parent=0 // pred_region
    _
  $region17: #{ssd_heads.1} parent=0 // pred_fallthru
    _
  %v18 = vld [vmem:[%s0] sm:$0xff]
  %v19 = vld [vmem:[%s0 + $0x8] sm:$0xff]
  %v20 = vld [vmem:[%s0 + $0x10] sm:$0xff]
  %v21 = vld [vmem:[%s0 + $0x18] sm:$0xff]
  %v22 = vld [vmem:[%s0 + $0x20] sm:$0xff]
  %v23 = vld [vmem:[%s0 + $0x28] sm:$0xff]
  %v24 = vld [vmem:[%s0 + $0x30] sm:$0xff]
  %v25 = vld [vmem:[%s0 + $0x38] sm:$0xff]
  %v26 = vld [vmem:[%s0 + $0x40] sm:$0xff]
  %v27 = vld [vmem:[%s0 + $0x48] sm:$0xff]
  %v28 = vld [vmem:[%s0 + $0x50] sm:$0xff]
  %v29 = vld [vmem:[%s0 + $0x58] sm:$0xff]
  %v30 = vld [vmem:[%s0 + $0x60] sm:$0xff]
  %v31 = vld [vmem:[%s0 + $0x68] sm:$0xff]
  %v32 = vld [vmem:[%s0 + $0x70] sm:$0xff]
  %v33 = vld [vmem:[%s0 + $0x78] sm:$0xff]
  %v34 = vld [vmem:[%s0 + $0x80] sm:$0xff]
  %v35 = vld [vmem:[%s0 + $0x88] sm:$0xff]
  %v36 = vld [vmem:[%s0 + $0x90] sm:$0xff]
  %v37 = vld [vmem:[%s0 + $0x98] sm:$0xff]
  %v38 = vld [vmem:[%s1] sm:$0xff]
  %v39 = vld [vmem:[%s1 + $0x8] sm:$0xf]
  %v40 = vld [vmem:[%s1 + $0xc] sm:$0xff]
  %v41 = vld [vmem:[%s1 + $0x14] sm:$0xf]
  %v42 = vld [vmem:[%s1 + $0x18] sm:$0xff]
  %v43 = vld [vmem:[%s1 + $0x20] sm:$0xf]
  %v44 = vld [vmem:[%s1 + $0x24] sm:$0xff]
  %v45 = vld [vmem:[%s1 + $0x2c] sm:$0xf]
  %v46 = vld [vmem:[%s1 + $0x30] sm:$0xff]
  %v47 = vld [vmem:[%s1 + $0x38] sm:$0xf]
  %v48 = vld [vmem:[%s1 + $0x3c] sm:$0xff]
  %v49 = vld [vmem:[%s1 + $0x44] sm:$0xf]
  %v50 = vld [vmem:[%s1 + $0x48] sm:$0xff]
  %v51 = vld [vmem:[%s1 + $0x50] sm:$0xf]
  %v52 = vld [vmem:[%s1 + $0x54] sm:$0xff]
  %v53 = vld [vmem:[%s1 + $0x5c] sm:$0xf]
  %v54 = vld [vmem:[%s1 + $0x60] sm:$0xff]
  %v55 = vld [vmem:[%s1 + $0x68] sm:$0xf]
  %v56 = vld [vmem:[%s1 + $0x6c] sm:$0xff]
  %v57 = vld [vmem:[%s1 + $0x74] sm:$0xf]
  %v58 = vld [vmem:[%s1 + $0x78] sm:$0xff]
  %v59 = vld [vmem:[%s1 + $0x80] sm:$0xf]
  %v60 = vld [vmem:[%s1 + $0x84] sm:$0xff]
  %v61 = vld [vmem:[%s1 + $0x8c] sm:$0xf]
  %v62 = vld [vmem:[%s1 + $0x90] sm:$0xff]
  %v63 = vld [vmem:[%s1 + $0x98] sm:$0xf]
  %v64 = vld [vmem:[%s1 + $0x9c] sm:$0xff]
  %v65 = vld [vmem:[%s1 + $0xa4] sm:$0xf]
  %v66 = vld [vmem:[%s1 + $0xa8] sm:$0xff]
  %v67 = vld [vmem:[%s1 + $0xb0] sm:$0xf]
  %v68 = vld [vmem:[%s1 + $0xb4] sm:$0xff]
  %v69 = vld [vmem:[%s1 + $0xbc] sm:$0xf]
  %v70 = vld [vmem:[%s1 + $0xc0] sm:$0xff]
  %v71 = vld [vmem:[%s1 + $0xc8] sm:$0xf]
  %v72 = vld [vmem:[%s1 + $0xcc] sm:$0xff]
  %v73 = vld [vmem:[%s1 + $0xd4] sm:$0xf]
  %v74 = vld [vmem:[%s1 + $0xd8] sm:$0xff]
  %v75 = vld [vmem:[%s1 + $0xe0] sm:$0xf]
  %v76 = vld [vmem:[%s1 + $0xe4] sm:$0xff]
  %v77 = vld [vmem:[%s1 + $0xec] sm:$0xf]
  %v78 = vld [vmem:[%s1 + $0xf0] sm:$0xff]
  %v79 = vld [vmem:[%s1 + $0xf8] sm:$0xf]
  %v80 = vld [vmem:[%s1 + $0xfc] sm:$0xff]
  %v81 = vld [vmem:[%s1 + $0x104] sm:$0xf]
  %v82 = vld [vmem:[%s1 + $0x108] sm:$0xff]
  %v83 = vld [vmem:[%s1 + $0x110] sm:$0xf]
  %v84 = vld [vmem:[%s1 + $0x114] sm:$0xff]
  %v85 = vld [vmem:[%s1 + $0x11c] sm:$0xf]
  %v86 = vld [vmem:[%s1 + $0x120] sm:$0xff]
  %v87 = vld [vmem:[%s1 + $0x128] sm:$0xf]
  %v88 = vld [vmem:[%s1 + $0x12c] sm:$0xff]
  %v89 = vld [vmem:[%s1 + $0x134] sm:$0xf]
  %v90 = vld [vmem:[%s1 + $0x138] sm:$0xff]
  %v91 = vld [vmem:[%s1 + $0x140] sm:$0xf]
  %v92 = vld [vmem:[%s1 + $0x144] sm:$0xff]
  %v93 = vld [vmem:[%s1 + $0x14c] sm:$0xf]
  %v94 = vld [vmem:[%s1 + $0x150] sm:$0xff]
  %v95 = vld [vmem:[%s1 + $0x158] sm:$0xf]
  %v96 = vld [vmem:[%s1 + $0x15c] sm:$0xff]
  %v97 = vld [vmem:[%s1 + $0x164] sm:$0xf]
  %v98 = vld [vmem:[%s1 + $0x168] sm:$0xff]
  %v99 = vld [vmem:[%s1 + $0x170] sm:$0xf]
  %v100 = vld [vmem:[%s1 + $0x174] sm:$0xff]
  %v101 = vld [vmem:[%s1 + $0x17c] sm:$0xf]
  %v102 = vld [vmem:[%s1 + $0x180] sm:$0xff]
  %v103 = vld [vmem:[%s1 + $0x188] sm:$0xf]
  %v104 = vld [vmem:[%s1 + $0x18c] sm:$0xff]
  %v105 = vld [vmem:[%s1 + $0x194] sm:$0xf]
  %v106 = vld [vmem:[%s1 + $0x198] sm:$0xff]
  %v107 = vld [vmem:[%s1 + $0x1a0] sm:$0xf]
  %v108 = vld [vmem:[%s1 + $0x1a4] sm:$0xff]
  %v109 = vld [vmem:[%s1 + $0x1ac] sm:$0xf]
  %v110 = vld [vmem:[%s1 + $0x1b0] sm:$0xff]
  %v111 = vld [vmem:[%s1 + $0x1b8] sm:$0xf]
  %v112 = vld [vmem:[%s1 + $0x1bc] sm:$0xff]
  %v113 = vld [vmem:[%s1 + $0x1c4] sm:$0xf]
  %v114 = vld [vmem:[%s1 + $0x1c8] sm:$0xff]
  %v115 = vld [vmem:[%s1 + $0x1d0] sm:$0xf]
  %v116 = vld [vmem:[%s1 + $0x1d4] sm:$0xff]
  %v117 = vld [vmem:[%s1 + $0x1dc] sm:$0xf]
  %v118 = vld [vmem:[%s1 + $0x1e0] sm:$0xff]
  %v119 = vld [vmem:[%s1 + $0x1e8] sm:$0xf]
  %v120 = vld [vmem:[%s1 + $0x1ec] sm:$0xff]
  %v121 = vld [vmem:[%s1 + $0x1f4] sm:$0xf]
  %v122 = vld [vmem:[%s1 + $0x1f8] sm:$0xff]
  %v123 = vld [vmem:[%s1 + $0x200] sm:$0xf]
  %v124 = vld [vmem:[%s1 + $0x204] sm:$0xff]
  %v125 = vld [vmem:[%s1 + $0x20c] sm:$0xf]
  %v126 = vld [vmem:[%s1 + $0x210] sm:$0xff]
  %v127 = vld [vmem:[%s1 + $0x218] sm:$0xf]
  %v128 = vld [vmem:[%s1 + $0x21c] sm:$0xff]
  %v129 = vld [vmem:[%s1 + $0x224] sm:$0xf]
  %v130 = vld [vmem:[%s1 + $0x228] sm:$0xff]
  %v131 = vld [vmem:[%s1 + $0x230] sm:$0xf]
  %v132 = vld [vmem:[%s1 + $0x234] sm:$0xff]
  %v133 = vld [vmem:[%s1 + $0x23c] sm:$0xf]
  %v134 = vld [vmem:[%s1 + $0x240] sm:$0xff]
  %v135 = vld [vmem:[%s1 + $0x248] sm:$0xf]
  %v136 = vld [vmem:[%s1 + $0x24c] sm:$0xff]
  %v137 = vld [vmem:[%s1 + $0x254] sm:$0xf]
  %v138 = vld [vmem:[%s1 + $0x258] sm:$0xff]
  %v139 = vld [vmem:[%s1 + $0x260] sm:$0xf]
  %v140 = vld [vmem:[%s1 + $0x264] sm:$0xff]
  %v141 = vld [vmem:[%s1 + $0x26c] sm:$0xf]
  %v142 = vld [vmem:[%s1 + $0x270] sm:$0xff]
  %v143 = vld [vmem:[%s1 + $0x278] sm:$0xf]
  %v144 = vld [vmem:[%s1 + $0x27c] sm:$0xff]
  %v145 = vld [vmem:[%s1 + $0x284] sm:$0xf]
  %v146 = vld [vmem:[%s1 + $0x288] sm:$0xff]
  %v147 = vld [vmem:[%s1 + $0x290] sm:$0xf]
  %v148 = vld [vmem:[%s1 + $0x294] sm:$0xff]
  %v149 = vld [vmem:[%s1 + $0x29c] sm:$0xf]
  %v150 = vld [vmem:[%s1 + $0x2a0] sm:$0xff]
  %v151 = vld [vmem:[%s1 + $0x2a8] sm:$0xf]
  %v152 = vld [vmem:[%s1 + $0x2ac] sm:$0xff]
  %v153 = vld [vmem:[%s1 + $0x2b4] sm:$0xf]
  %v154 = vld [vmem:[%s1 + $0x2b8] sm:$0xff]
  %v155 = vld [vmem:[%s1 + $0x2c0] sm:$0xf]
  %v156 = vld [vmem:[%s1 + $0x2c4] sm:$0xff]
  %v157 = vld [vmem:[%s1 + $0x2cc] sm:$0xf]
  %v158 = vld [vmem:[%s1 + $0x2d0] sm:$0xff]
  %v159 = vld [vmem:[%s1 + $0x2d8] sm:$0xf]
  %v160 = vld [vmem:[%s1 + $0x2dc] sm:$0xff]
  %v161 = vld [vmem:[%s1 + $0x2e4] sm:$0xf]
  %v162 = vld [vmem:[%s1 + $0x2e8] sm:$0xff]
  %v163 = vld [vmem:[%s1 + $0x2f0] sm:$0xf]
  %v164 = vld [vmem:[%s1 + $0x2f4] sm:$0xff]
  %v165 = vld [vmem:[%s1 + $0x2fc] sm:$0xf]
  %v166 = vld [vmem:[%s1 + $0x300] sm:$0xff]
  %v167 = vld [vmem:[%s1 + $0x308] sm:$0xf]
  %v168 = vld [vmem:[%s1 + $0x30c] sm:$0xff]
  %v169 = vld [vmem:[%s1 + $0x314] sm:$0xf]
  %v170 = vld [vmem:[%s1 + $0x318] sm:$0xff]
  %v171 = vld [vmem:[%s1 + $0x320] sm:$0xf]
  %v172 = vld [vmem:[%s1 + $0x324] sm:$0xff]
  %v173 = vld [vmem:[%s1 + $0x32c] sm:$0xf]
  %v174 = vld [vmem:[%s1 + $0x330] sm:$0xff]
  %v175 = vld [vmem:[%s1 + $0x338] sm:$0xf]
  %v176 = vld [vmem:[%s1 + $0x33c] sm:$0xff]
  %v177 = vld [vmem:[%s1 + $0x344] sm:$0xf]
  %v178 = vld [vmem:[%s1 + $0x348] sm:$0xff]
  %v179 = vld [vmem:[%s1 + $0x350] sm:$0xf]
  %v180 = vld [vmem:[%s1 + $0x354] sm:$0xff]
  %v181 = vld [vmem:[%s1 + $0x35c] sm:$0xf]
  %v182 = vld [vmem:[%s1 + $0x360] sm:$0xff]
  %v183 = vld [vmem:[%s1 + $0x368] sm:$0xf]
  %v184 = vld [vmem:[%s1 + $0x36c] sm:$0xff]
  %v185 = vld [vmem:[%s1 + $0x374] sm:$0xf]
  %v186 = vld [vmem:[%s1 + $0x378] sm:$0xff]
  %v187 = vld [vmem:[%s1 + $0x380] sm:$0xf]
  %v188 = vld [vmem:[%s1 + $0x384] sm:$0xff]
  %v189 = vld [vmem:[%s1 + $0x38c] sm:$0xf]
  %v190 = vld [vmem:[%s1 + $0x390] sm:$0xff]
  %v191 = vld [vmem:[%s1 + $0x398] sm:$0xf]
  %v192 = vld [vmem:[%s1 + $0x39c] sm:$0xff]
  %v193 = vld [vmem:[%s1 + $0x3a4] sm:$0xf]
  %v194 = vld [vmem:[%s1 + $0x3a8] sm:$0xff]
  %v195 = vld [vmem:[%s1 + $0x3b0] sm:$0xf]
  %v196 = vld [vmem:[%s1 + $0x3b4] sm:$0xff]
  %v197 = vld [vmem:[%s1 + $0x3bc] sm:$0xf]
  %v198 = vld [vmem:[%s1 + $0x3c0] sm:$0xff]
  %v199 = vld [vmem:[%s1 + $0x3c8] sm:$0xf]
  %v200 = vld [vmem:[%s1 + $0x3cc] sm:$0xff]
  %v201 = vld [vmem:[%s1 + $0x3d4] sm:$0xf]
  %v202 = vld [vmem:[%s1 + $0x3d8] sm:$0xff]
  %v203 = vld [vmem:[%s1 + $0x3e0] sm:$0xf]
  %v204 = vld [vmem:[%s1 + $0x3e4] sm:$0xff]
  %v205 = vld [vmem:[%s1 + $0x3ec] sm:$0xf]
  %v206 = vld [vmem:[%s1 + $0x3f0] sm:$0xff]
  %v207 = vld [vmem:[%s1 + $0x3f8] sm:$0xf]
  %v208 = vld [vmem:[%s1 + $0x3fc] sm:$0xff]
  %v209 = vld [vmem:[%s1 + $0x404] sm:$0xf]
  %v210 = vld [vmem:[%s1 + $0x408] sm:$0xff]
  %v211 = vld [vmem:[%s1 + $0x410] sm:$0xf]
  %v212 = vld [vmem:[%s1 + $0x414] sm:$0xff]
  %v213 = vld [vmem:[%s1 + $0x41c] sm:$0xf]
  %v214 = vld [vmem:[%s1 + $0x420] sm:$0xff]
  %v215 = vld [vmem:[%s1 + $0x428] sm:$0xf]
  %v216 = vld [vmem:[%s1 + $0x42c] sm:$0xff]
  %v217 = vld [vmem:[%s1 + $0x434] sm:$0xf]
  %v218 = vld [vmem:[%s1 + $0x438] sm:$0xff]
  %v219 = vld [vmem:[%s1 + $0x440] sm:$0xf]
  %v220 = vld [vmem:[%s1 + $0x444] sm:$0xff]
  %v221 = vld [vmem:[%s1 + $0x44c] sm:$0xf]
  %v222 = vld [vmem:[%s1 + $0x450] sm:$0xff]
  %v223 = vld [vmem:[%s1 + $0x458] sm:$0xf]
  %v224 = vld [vmem:[%s1 + $0x45c] sm:$0xff]
  %v225 = vld [vmem:[%s1 + $0x464] sm:$0xf]
  %v226 = vld [vmem:[%s1 + $0x468] sm:$0xff]
  %v227 = vld [vmem:[%s1 + $0x470] sm:$0xf]
  %v228 = vld [vmem:[%s1 + $0x474] sm:$0xff]
  %v229 = vld [vmem:[%s1 + $0x47c] sm:$0xf]
  %v230 = vld [vmem:[%s1 + $0x480] sm:$0xff]
  %v231 = vld [vmem:[%s1 + $0x488] sm:$0xf]
  %v232 = vld [vmem:[%s1 + $0x48c] sm:$0xff]
  %v233 = vld [vmem:[%s1 + $0x494] sm:$0xf]
  %v234 = vld [vmem:[%s1 + $0x498] sm:$0xff]
  %v235 = vld [vmem:[%s1 + $0x4a0] sm:$0xf]
  %v236 = vld [vmem:[%s1 + $0x4a4] sm:$0xff]
  %v237 = vld [vmem:[%s1 + $0x4ac] sm:$0xf]
  %v238 = vld [vmem:[%s1 + $0x4b0] sm:$0xff]
  %v239 = vld [vmem:[%s1 + $0x4b8] sm:$0xf]
  %v240 = vld [vmem:[%s1 + $0x4bc] sm:$0xff]
  %v241 = vld [vmem:[%s1 + $0x4c4] sm:$0xf]
  %v242 = vld [vmem:[%s1 + $0x4c8] sm:$0xff]
  %v243 = vld [vmem:[%s1 + $0x4d0] sm:$0xf]
  %v244 = vld [vmem:[%s1 + $0x4d4] sm:$0xff]
  %v245 = vld [vmem:[%s1 + $0x4dc] sm:$0xf]
  %v246 = vld [vmem:[%s1 + $0x4e0] sm:$0xff]
  %v247 = vld [vmem:[%s1 + $0x4e8] sm:$0xf]
  %v248 = vld [vmem:[%s1 + $0x4ec] sm:$0xff]
  %v249 = vld [vmem:[%s1 + $0x4f4] sm:$0xf]
  %v250 = vld [vmem:[%s1 + $0x4f8] sm:$0xff]
  %v251 = vld [vmem:[%s1 + $0x500] sm:$0xf]
  %v252 = vld [vmem:[%s1 + $0x504] sm:$0xff]
  %v253 = vld [vmem:[%s1 + $0x50c] sm:$0xf]
  %v254 = vld [vmem:[%s1 + $0x510] sm:$0xff]
  %v255 = vld [vmem:[%s1 + $0x518] sm:$0xf]
  %v256 = vld [vmem:[%s1 + $0x51c] sm:$0xff]
  %v257 = vld [vmem:[%s1 + $0x524] sm:$0xf]
  %v258 = vld [vmem:[%s1 + $0x528] sm:$0xff]
  %v259 = vld [vmem:[%s1 + $0x530] sm:$0xf]
  %v260 = vld [vmem:[%s1 + $0x534] sm:$0xff]
  %v261 = vld [vmem:[%s1 + $0x53c] sm:$0xf]
  %v262 = vld [vmem:[%s1 + $0x540] sm:$0xff]
  %v263 = vld [vmem:[%s1 + $0x548] sm:$0xf]
  %v264 = vld [vmem:[%s1 + $0x54c] sm:$0xff]
  %v265 = vld [vmem:[%s1 + $0x554] sm:$0xf]
  %v266 = vld [vmem:[%s1 + $0x558] sm:$0xff]
  %v267 = vld [vmem:[%s1 + $0x560] sm:$0xf]
  %v268 = vld [vmem:[%s1 + $0x564] sm:$0xff]
  %v269 = vld [vmem:[%s1 + $0x56c] sm:$0xf]
  %v270 = vld [vmem:[%s1 + $0x570] sm:$0xff]
  %v271 = vld [vmem:[%s1 + $0x578] sm:$0xf]
  %v272 = vld [vmem:[%s1 + $0x57c] sm:$0xff]
  %v273 = vld [vmem:[%s1 + $0x584] sm:$0xf]
  %v274 = vld [vmem:[%s1 + $0x588] sm:$0xff]
  %v275 = vld [vmem:[%s1 + $0x590] sm:$0xf]
  %v276 = vld [vmem:[%s1 + $0x594] sm:$0xff]
  %v277 = vld [vmem:[%s1 + $0x59c] sm:$0xf]
  %v278 = vld [vmem:[%s1 + $0x5a0] sm:$0xff]
  %v279 = vld [vmem:[%s1 + $0x5a8] sm:$0xf]
  %v280 = vld [vmem:[%s1 + $0x5ac] sm:$0xff]
  %v281 = vld [vmem:[%s1 + $0x5b4] sm:$0xf]
  %v282 = vld [vmem:[%s1 + $0x5b8] sm:$0xff]
  %v283 = vld [vmem:[%s1 + $0x5c0] sm:$0xf]
  %v284 = vld [vmem:[%s1 + $0x5c4] sm:$0xff]
  %v285 = vld [vmem:[%s1 + $0x5cc] sm:$0xf]
  %v286 = vld [vmem:[%s1 + $0x5d0] sm:$0xff]
  %v287 = vld [vmem:[%s1 + $0x5d8] sm:$0xf]
  %v288 = vld [vmem:[%s1 + $0x5dc] sm:$0xff]
  %v289 = vld [vmem:[%s1 + $0x5e4] sm:$0xf]
  %v290 = vld [vmem:[%s1 + $0x5e8] sm:$0xff]
  %v291 = vld [vmem:[%s1 + $0x5f0] sm:$0xf]
  %v292 = vld [vmem:[%s1 + $0x5f4] sm:$0xff]
  %v293 = vld [vmem:[%s1 + $0x5fc] sm:$0xf]
  %v294 = vld [vmem:[%s1 + $0x600] sm:$0xff]
  %v295 = vld [vmem:[%s1 + $0x608] sm:$0xf]
  %v296 = vld [vmem:[%s1 + $0x60c] sm:$0xff]
  %v297 = vld [vmem:[%s1 + $0x614] sm:$0xf]
  %v298 = vld [vmem:[%s1 + $0x618] sm:$0xff]
  %v299 = vld [vmem:[%s1 + $0x620] sm:$0xf]
  %v300 = vld [vmem:[%s1 + $0x624] sm:$0xff]
  %v301 = vld [vmem:[%s1 + $0x62c] sm:$0xf]
  %v302 = vld [vmem:[%s1 + $0x630] sm:$0xff]
  %v303 = vld [vmem:[%s1 + $0x638] sm:$0xf]
  %v304 = vld [vmem:[%s1 + $0x63c] sm:$0xff]
  %v305 = vld [vmem:[%s1 + $0x644] sm:$0xf]
  %v306 = vld [vmem:[%s1 + $0x648] sm:$0xff]
  %v307 = vld [vmem:[%s1 + $0x650] sm:$0xf]
  %v308 = vld [vmem:[%s1 + $0x654] sm:$0xff]
  %v309 = vld [vmem:[%s1 + $0x65c] sm:$0xf]
  %v310 = vld [vmem:[%s1 + $0x660] sm:$0xff]
  %v311 = vld [vmem:[%s1 + $0x668] sm:$0xf]
  %v312 = vld [vmem:[%s1 + $0x66c] sm:$0xff]
  %v313 = vld [vmem:[%s1 + $0x674] sm:$0xf]
  %v314 = vld [vmem:[%s1 + $0x678] sm:$0xff]
  %v315 = vld [vmem:[%s1 + $0x680] sm:$0xf]
  %v316 = vld [vmem:[%s1 + $0x684] sm:$0xff]
  %v317 = vld [vmem:[%s1 + $0x68c] sm:$0xf]
  %v318 = vld [vmem:[%s1 + $0x690] sm:$0xff]
  %v319 = vld [vmem:[%s1 + $0x698] sm:$0xf]
  %v320 = vld [vmem:[%s1 + $0x69c] sm:$0xff]
  %v321 = vld [vmem:[%s1 + $0x6a4] sm:$0xf]
  %v322 = vld [vmem:[%s1 + $0x6a8] sm:$0xff]
  %v323 = vld [vmem:[%s1 + $0x6b0] sm:$0xf]
  %v324 = vld [vmem:[%s1 + $0x6b4] sm:$0xff]
  %v325 = vld [vmem:[%s1 + $0x6bc] sm:$0xf]
  %v326 = vld [vmem:[%s1 + $0x6c0] sm:$0xff]
  %v327 = vld [vmem:[%s1 + $0x6c8] sm:$0xf]
  %v328 = vld [vmem:[%s1 + $0x6cc] sm:$0xff]
  %v329 = vld [vmem:[%s1 + $0x6d4] sm:$0xf]
  %v330 = vld [vmem:[%s1 + $0x6d8] sm:$0xff]
  %v331 = vld [vmem:[%s1 + $0x6e0] sm:$0xf]
  %v332 = vld [vmem:[%s1 + $0x6e4] sm:$0xff]
  %v333 = vld [vmem:[%s1 + $0x6ec] sm:$0xf]
  %v334 = vld [vmem:[%s1 + $0x6f0] sm:$0xff]
  %v335 = vld [vmem:[%s1 + $0x6f8] sm:$0xf]
  %v336 = vld [vmem:[%s1 + $0x6fc] sm:$0xff]
  %v337 = vld [vmem:[%s1 + $0x704] sm:$0xf]
  %v338 = vld [vmem:[%s1 + $0x708] sm:$0xff]
  %v339 = vld [vmem:[%s1 + $0x710] sm:$0xf]
  %v340 = vld [vmem:[%s1 + $0x714] sm:$0xff]
  %v341 = vld [vmem:[%s1 + $0x71c] sm:$0xf]
  %v342 = vld [vmem:[%s1 + $0x720] sm:$0xff]
  %v343 = vld [vmem:[%s1 + $0x728] sm:$0xf]
  %v344 = vld [vmem:[%s1 + $0x72c] sm:$0xff]
  %v345 = vld [vmem:[%s1 + $0x734] sm:$0xf]
  %v346 = vld [vmem:[%s1 + $0x738] sm:$0xff]
  %v347 = vld [vmem:[%s1 + $0x740] sm:$0xf]
  %v348 = vld [vmem:[%s1 + $0x744] sm:$0xff]
  %v349 = vld [vmem:[%s1 + $0x74c] sm:$0xf]
  %v350 = vld [vmem:[%s1 + $0x750] sm:$0xff]
  %v351 = vld [vmem:[%s1 + $0x758] sm:$0xf]
  %v352 = vld [vmem:[%s1 + $0x75c] sm:$0xff]
  %v353 = vld [vmem:[%s1 + $0x764] sm:$0xf]
  %v354 = vld [vmem:[%s1 + $0x768] sm:$0xff]
  %v355 = vld [vmem:[%s1 + $0x770] sm:$0xf]
  %v356 = vld [vmem:[%s1 + $0x774] sm:$0xff]
  %v357 = vld [vmem:[%s1 + $0x77c] sm:$0xf]
  %v378 = vunpack.c.l.b16 %v18
  %v379 = vunpack.c.h.b16 %v18
  %v380 = vunpack.c.l.b16 %v19
  %v381 = vunpack.c.h.b16 %v19
  %v382 = vunpack.c.l.b16 %v20
  %v383 = vunpack.c.h.b16 %v20
  %v384 = vunpack.c.l.b16 %v21
  %v385 = vunpack.c.h.b16 %v21
  %v386 = vunpack.c.l.b16 %v22
  %v387 = vunpack.c.h.b16 %v22
  %v388 = vunpack.c.l.b16 %v23
  %v389 = vunpack.c.h.b16 %v23
  %v390 = vunpack.c.l.b16 %v24
  %v391 = vunpack.c.h.b16 %v24
  %v392 = vunpack.c.l.b16 %v25
  %v393 = vunpack.c.h.b16 %v25
  %v394 = vunpack.c.l.b16 %v26
  %v395 = vunpack.c.h.b16 %v26
  %v396 = vunpack.c.l.b16 %v27
  %v397 = vunpack.c.h.b16 %v27
  %v398 = vunpack.c.l.b16 %v28
  %v399 = vunpack.c.h.b16 %v28
  %v400 = vunpack.c.l.b16 %v29
  %v401 = vunpack.c.h.b16 %v29
  %v402 = vunpack.c.l.b16 %v30
  %v403 = vunpack.c.h.b16 %v30
  %v404 = vunpack.c.l.b16 %v31
  %v405 = vunpack.c.h.b16 %v31
  %v406 = vunpack.c.l.b16 %v32
  %v407 = vunpack.c.h.b16 %v32
  %v408 = vunpack.c.l.b16 %v33
  %v409 = vunpack.c.h.b16 %v33
  %v410 = vunpack.c.l.b16 %v34
  %v411 = vunpack.c.h.b16 %v34
  %v412 = vunpack.c.l.b16 %v35
  %v413 = vunpack.c.h.b16 %v35
  %v414 = vunpack.c.l.b16 %v36
  %v415 = vunpack.c.h.b16 %v36
  %v416 = vunpack.c.l.b16 %v37
  %v417 = vunpack.c.h.b16 %v37
  %v418 = vpack.c.b16 %v388, %v378
  %v419 = vpack.c.b16 %v389, %v379
  %v420 = vpack.c.b16 %v390, %v380
  %v421 = vpack.c.b16 %v391, %v381
  %v422 = vpack.c.b16 %v392, %v382
  %v423 = vpack.c.b16 %v393, %v383
  %v424 = vpack.c.b16 %v394, %v384
  %v425 = vpack.c.b16 %v395, %v385
  %v426 = vpack.c.b16 %v396, %v386
  %v427 = vpack.c.b16 %v397, %v387
  %v428 = vpack.c.b16 %v408, %v398
  %v429 = vpack.c.b16 %v409, %v399
  %v430 = vpack.c.b16 %v410, %v400
  %v431 = vpack.c.b16 %v411, %v401
  %v432 = vpack.c.b16 %v412, %v402
  %v433 = vpack.c.b16 %v413, %v403
  %v434 = vpack.c.b16 %v414, %v404
  %v435 = vpack.c.b16 %v415, %v405
  %v436 = vpack.c.b16 %v416, %v406
  %v437 = vpack.c.b16 %v417, %v407
  %v778 = vunpack.c.l.b16 %v38
  %v779 = vunpack.c.h.b16 %v38
  %v780 = vunpack.c.l.b16 %v39
  %v781 = vunpack.c.l.b16 %v40
  %v782 = vunpack.c.h.b16 %v40
  %v783 = vunpack.c.l.b16 %v41
  %v784 = vunpack.c.l.b16 %v42
  %v785 = vunpack.c.h.b16 %v42
  %v786 = vunpack.c.l.b16 %v43
  %v787 = vunpack.c.l.b16 %v44
  %v788 = vunpack.c.h.b16 %v44
  %v789 = vunpack.c.l.b16 %v45
  %v790 = vunpack.c.l.b16 %v46
  %v791 = vunpack.c.h.b16 %v46
  %v792 = vunpack.c.l.b16 %v47
  %v793 = vunpack.c.l.b16 %v48
  %v794 = vunpack.c.h.b16 %v48
  %v795 = vunpack.c.l.b16 %v49
  %v796 = vunpack.c.l.b16 %v50
  %v797 = vunpack.c.h.b16 %v50
  %v798 = vunpack.c.l.b16 %v51
  %v799 = vunpack.c.l.b16 %v52
  %v800 = vunpack.c.h.b16 %v52
  %v801 = vunpack.c.l.b16 %v53
  %v802 = vunpack.c.l.b16 %v54
  %v803 = vunpack.c.h.b16 %v54
  %v804 = vunpack.c.l.b16 %v55
  %v805 = vunpack.c.l.b16 %v56
  %v806 = vunpack.c.h.b16 %v56
  %v807 = vunpack.c.l.b16 %v57
  %v808 = vunpack.c.l.b16 %v58
  %v809 = vunpack.c.h.b16 %v58
  %v810 = vunpack.c.l.b16 %v59
  %v811 = vunpack.c.l.b16 %v60
  %v812 = vunpack.c.h.b16 %v60
  %v813 = vunpack.c.l.b16 %v61
  %v814 = vunpack.c.l.b16 %v62
  %v815 = vunpack.c.h.b16 %v62
  %v816 = vunpack.c.l.b16 %v63
  %v817 = vunpack.c.l.b16 %v64
  %v818 = vunpack.c.h.b16 %v64
  %v819 = vunpack.c.l.b16 %v65
  %v820 = vunpack.c.l.b16 %v66
  %v821 = vunpack.c.h.b16 %v66
  %v822 = vunpack.c.l.b16 %v67
  %v823 = vunpack.c.l.b16 %v68
  %v824 = vunpack.c.h.b16 %v68
  %v825 = vunpack.c.l.b16 %v69
  %v826 = vunpack.c.l.b16 %v70
  %v827 = vunpack.c.h.b16 %v70
  %v828 = vunpack.c.l.b16 %v71
  %v829 = vunpack.c.l.b16 %v72
  %v830 = vunpack.c.h.b16 %v72
  %v831 = vunpack.c.l.b16 %v73
  %v832 = vunpack.c.l.b16 %v74
  %v833 = vunpack.c.h.b16 %v74
  %v834 = vunpack.c.l.b16 %v75
  %v835 = vunpack.c.l.b16 %v76
  %v836 = vunpack.c.h.b16 %v76
  %v837 = vunpack.c.l.b16 %v77
  %v838 = vunpack.c.l.b16 %v78
  %v839 = vunpack.c.h.b16 %v78
  %v840 = vunpack.c.l.b16 %v79
  %v841 = vunpack.c.l.b16 %v80
  %v842 = vunpack.c.h.b16 %v80
  %v843 = vunpack.c.l.b16 %v81
  %v844 = vunpack.c.l.b16 %v82
  %v845 = vunpack.c.h.b16 %v82
  %v846 = vunpack.c.l.b16 %v83
  %v847 = vunpack.c.l.b16 %v84
  %v848 = vunpack.c.h.b16 %v84
  %v849 = vunpack.c.l.b16 %v85
  %v850 = vunpack.c.l.b16 %v86
  %v851 = vunpack.c.h.b16 %v86
  %v852 = vunpack.c.l.b16 %v87
  %v853 = vunpack.c.l.b16 %v88
  %v854 = vunpack.c.h.b16 %v88
  %v855 = vunpack.c.l.b16 %v89
  %v856 = vunpack.c.l.b16 %v90
  %v857 = vunpack.c.h.b16 %v90
  %v858 = vunpack.c.l.b16 %v91
  %v859 = vunpack.c.l.b16 %v92
  %v860 = vunpack.c.h.b16 %v92
  %v861 = vunpack.c.l.b16 %v93
  %v862 = vunpack.c.l.b16 %v94
  %v863 = vunpack.c.h.b16 %v94
  %v864 = vunpack.c.l.b16 %v95
  %v865 = vunpack.c.l.b16 %v96
  %v866 = vunpack.c.h.b16 %v96
  %v867 = vunpack.c.l.b16 %v97
  %v868 = vunpack.c.l.b16 %v98
  %v869 = vunpack.c.h.b16 %v98
  %v870 = vunpack.c.l.b16 %v99
  %v871 = vunpack.c.l.b16 %v100
  %v872 = vunpack.c.h.b16 %v100
  %v873 = vunpack.c.l.b16 %v101
  %v874 = vunpack.c.l.b16 %v102
  %v875 = vunpack.c.h.b16 %v102
  %v876 = vunpack.c.l.b16 %v103
  %v877 = vunpack.c.l.b16 %v104
  %v878 = vunpack.c.h.b16 %v104
  %v879 = vunpack.c.l.b16 %v105
  %v880 = vunpack.c.l.b16 %v106
  %v881 = vunpack.c.h.b16 %v106
  %v882 = vunpack.c.l.b16 %v107
  %v883 = vunpack.c.l.b16 %v108
  %v884 = vunpack.c.h.b16 %v108
  %v885 = vunpack.c.l.b16 %v109
  %v886 = vunpack.c.l.b16 %v110
  %v887 = vunpack.c.h.b16 %v110
  %v888 = vunpack.c.l.b16 %v111
  %v889 = vunpack.c.l.b16 %v112
  %v890 = vunpack.c.h.b16 %v112
  %v891 = vunpack.c.l.b16 %v113
  %v892 = vunpack.c.l.b16 %v114
  %v893 = vunpack.c.h.b16 %v114
  %v894 = vunpack.c.l.b16 %v115
  %v895 = vunpack.c.l.b16 %v116
  %v896 = vunpack.c.h.b16 %v116
  %v897 = vunpack.c.l.b16 %v117
  %v898 = vunpack.c.l.b16 %v118
  %v899 = vunpack.c.h.b16 %v118
  %v900 = vunpack.c.l.b16 %v119
  %v901 = vunpack.c.l.b16 %v120
  %v902 = vunpack.c.h.b16 %v120
  %v903 = vunpack.c.l.b16 %v121
  %v904 = vunpack.c.l.b16 %v122
  %v905 = vunpack.c.h.b16 %v122
  %v906 = vunpack.c.l.b16 %v123
  %v907 = vunpack.c.l.b16 %v124
  %v908 = vunpack.c.h.b16 %v124
  %v909 = vunpack.c.l.b16 %v125
  %v910 = vunpack.c.l.b16 %v126
  %v911 = vunpack.c.h.b16 %v126
  %v912 = vunpack.c.l.b16 %v127
  %v913 = vunpack.c.l.b16 %v128
  %v914 = vunpack.c.h.b16 %v128
  %v915 = vunpack.c.l.b16 %v129
  %v916 = vunpack.c.l.b16 %v130
  %v917 = vunpack.c.h.b16 %v130
  %v918 = vunpack.c.l.b16 %v131
  %v919 = vunpack.c.l.b16 %v132
  %v920 = vunpack.c.h.b16 %v132
  %v921 = vunpack.c.l.b16 %v133
  %v922 = vunpack.c.l.b16 %v134
  %v923 = vunpack.c.h.b16 %v134
  %v924 = vunpack.c.l.b16 %v135
  %v925 = vunpack.c.l.b16 %v136
  %v926 = vunpack.c.h.b16 %v136
  %v927 = vunpack.c.l.b16 %v137
  %v928 = vunpack.c.l.b16 %v138
  %v929 = vunpack.c.h.b16 %v138
  %v930 = vunpack.c.l.b16 %v139
  %v931 = vunpack.c.l.b16 %v140
  %v932 = vunpack.c.h.b16 %v140
  %v933 = vunpack.c.l.b16 %v141
  %v934 = vunpack.c.l.b16 %v142
  %v935 = vunpack.c.h.b16 %v142
  %v936 = vunpack.c.l.b16 %v143
  %v937 = vunpack.c.l.b16 %v144
  %v938 = vunpack.c.h.b16 %v144
  %v939 = vunpack.c.l.b16 %v145
  %v940 = vunpack.c.l.b16 %v146
  %v941 = vunpack.c.h.b16 %v146
  %v942 = vunpack.c.l.b16 %v147
  %v943 = vunpack.c.l.b16 %v148
  %v944 = vunpack.c.h.b16 %v148
  %v945 = vunpack.c.l.b16 %v149
  %v946 = vunpack.c.l.b16 %v150
  %v947 = vunpack.c.h.b16 %v150
  %v948 = vunpack.c.l.b16 %v151
  %v949 = vunpack.c.l.b16 %v152
  %v950 = vunpack.c.h.b16 %v152
  %v951 = vunpack.c.l.b16 %v153
  %v952 = vunpack.c.l.b16 %v154
  %v953 = vunpack.c.h.b16 %v154
  %v954 = vunpack.c.l.b16 %v155
  %v955 = vunpack.c.l.b16 %v156
  %v956 = vunpack.c.h.b16 %v156
  %v957 = vunpack.c.l.b16 %v157
  %v958 = vunpack.c.l.b16 %v158
  %v959 = vunpack.c.h.b16 %v158
  %v960 = vunpack.c.l.b16 %v159
  %v961 = vunpack.c.l.b16 %v160
  %v962 = vunpack.c.h.b16 %v160
  %v963 = vunpack.c.l.b16 %v161
  %v964 = vunpack.c.l.b16 %v162
  %v965 = vunpack.c.h.b16 %v162
  %v966 = vunpack.c.l.b16 %v163
  %v967 = vunpack.c.l.b16 %v164
  %v968 = vunpack.c.h.b16 %v164
  %v969 = vunpack.c.l.b16 %v165
  %v970 = vunpack.c.l.b16 %v166
  %v971 = vunpack.c.h.b16 %v166
  %v972 = vunpack.c.l.b16 %v167
  %v973 = vunpack.c.l.b16 %v168
  %v974 = vunpack.c.h.b16 %v168
  %v975 = vunpack.c.l.b16 %v169
  %v976 = vunpack.c.l.b16 %v170
  %v977 = vunpack.c.h.b16 %v170
  %v978 = vunpack.c.l.b16 %v171
  %v979 = vunpack.c.l.b16 %v172
  %v980 = vunpack.c.h.b16 %v172
  %v981 = vunpack.c.l.b16 %v173
  %v982 = vunpack.c.l.b16 %v174
  %v983 = vunpack.c.h.b16 %v174
  %v984 = vunpack.c.l.b16 %v175
  %v985 = vunpack.c.l.b16 %v176
  %v986 = vunpack.c.h.b16 %v176
  %v987 = vunpack.c.l.b16 %v177
  %v988 = vunpack.c.l.b16 %v178
  %v989 = vunpack.c.h.b16 %v178
  %v990 = vunpack.c.l.b16 %v179
  %v991 = vunpack.c.l.b16 %v180
  %v992 = vunpack.c.h.b16 %v180
  %v993 = vunpack.c.l.b16 %v181
  %v994 = vunpack.c.l.b16 %v182
  %v995 = vunpack.c.h.b16 %v182
  %v996 = vunpack.c.l.b16 %v183
  %v997 = vunpack.c.l.b16 %v184
  %v998 = vunpack.c.h.b16 %v184
  %v999 = vunpack.c.l.b16 %v185
  %v1000 = vunpack.c.l.b16 %v186
  %v1001 = vunpack.c.h.b16 %v186
  %v1002 = vunpack.c.l.b16 %v187
  %v1003 = vunpack.c.l.b16 %v188
  %v1004 = vunpack.c.h.b16 %v188
  %v1005 = vunpack.c.l.b16 %v189
  %v1006 = vunpack.c.l.b16 %v190
  %v1007 = vunpack.c.h.b16 %v190
  %v1008 = vunpack.c.l.b16 %v191
  %v1009 = vunpack.c.l.b16 %v192
  %v1010 = vunpack.c.h.b16 %v192
  %v1011 = vunpack.c.l.b16 %v193
  %v1012 = vunpack.c.l.b16 %v194
  %v1013 = vunpack.c.h.b16 %v194
  %v1014 = vunpack.c.l.b16 %v195
  %v1015 = vunpack.c.l.b16 %v196
  %v1016 = vunpack.c.h.b16 %v196
  %v1017 = vunpack.c.l.b16 %v197
  %v1018 = vunpack.c.l.b16 %v198
  %v1019 = vunpack.c.h.b16 %v198
  %v1020 = vunpack.c.l.b16 %v199
  %v1021 = vunpack.c.l.b16 %v200
  %v1022 = vunpack.c.h.b16 %v200
  %v1023 = vunpack.c.l.b16 %v201
  %v1024 = vunpack.c.l.b16 %v202
  %v1025 = vunpack.c.h.b16 %v202
  %v1026 = vunpack.c.l.b16 %v203
  %v1027 = vunpack.c.l.b16 %v204
  %v1028 = vunpack.c.h.b16 %v204
  %v1029 = vunpack.c.l.b16 %v205
  %v1030 = vunpack.c.l.b16 %v206
  %v1031 = vunpack.c.h.b16 %v206
  %v1032 = vunpack.c.l.b16 %v207
  %v1033 = vunpack.c.l.b16 %v208
  %v1034 = vunpack.c.h.b16 %v208
  %v1035 = vunpack.c.l.b16 %v209
  %v1036 = vunpack.c.l.b16 %v210
  %v1037 = vunpack.c.h.b16 %v210
  %v1038 = vunpack.c.l.b16 %v211
  %v1039 = vunpack.c.l.b16 %v212
  %v1040 = vunpack.c.h.b16 %v212
  %v1041 = vunpack.c.l.b16 %v213
  %v1042 = vunpack.c.l.b16 %v214
  %v1043 = vunpack.c.h.b16 %v214
  %v1044 = vunpack.c.l.b16 %v215
  %v1045 = vunpack.c.l.b16 %v216
  %v1046 = vunpack.c.h.b16 %v216
  %v1047 = vunpack.c.l.b16 %v217
  %v1048 = vunpack.c.l.b16 %v218
  %v1049 = vunpack.c.h.b16 %v218
  %v1050 = vunpack.c.l.b16 %v219
  %v1051 = vunpack.c.l.b16 %v220
  %v1052 = vunpack.c.h.b16 %v220
  %v1053 = vunpack.c.l.b16 %v221
  %v1054 = vunpack.c.l.b16 %v222
  %v1055 = vunpack.c.h.b16 %v222
  %v1056 = vunpack.c.l.b16 %v223
  %v1057 = vunpack.c.l.b16 %v224
  %v1058 = vunpack.c.h.b16 %v224
  %v1059 = vunpack.c.l.b16 %v225
  %v1060 = vunpack.c.l.b16 %v226
  %v1061 = vunpack.c.h.b16 %v226
  %v1062 = vunpack.c.l.b16 %v227
  %v1063 = vunpack.c.l.b16 %v228
  %v1064 = vunpack.c.h.b16 %v228
  %v1065 = vunpack.c.l.b16 %v229
  %v1066 = vunpack.c.l.b16 %v230
  %v1067 = vunpack.c.h.b16 %v230
  %v1068 = vunpack.c.l.b16 %v231
  %v1069 = vunpack.c.l.b16 %v232
  %v1070 = vunpack.c.h.b16 %v232
  %v1071 = vunpack.c.l.b16 %v233
  %v1072 = vunpack.c.l.b16 %v234
  %v1073 = vunpack.c.h.b16 %v234
  %v1074 = vunpack.c.l.b16 %v235
  %v1075 = vunpack.c.l.b16 %v236
  %v1076 = vunpack.c.h.b16 %v236
  %v1077 = vunpack.c.l.b16 %v237
  %v1078 = vunpack.c.l.b16 %v238
  %v1079 = vunpack.c.h.b16 %v238
  %v1080 = vunpack.c.l.b16 %v239
  %v1081 = vunpack.c.l.b16 %v240
  %v1082 = vunpack.c.h.b16 %v240
  %v1083 = vunpack.c.l.b16 %v241
  %v1084 = vunpack.c.l.b16 %v242
  %v1085 = vunpack.c.h.b16 %v242
  %v1086 = vunpack.c.l.b16 %v243
  %v1087 = vunpack.c.l.b16 %v244
  %v1088 = vunpack.c.h.b16 %v244
  %v1089 = vunpack.c.l.b16 %v245
  %v1090 = vunpack.c.l.b16 %v246
  %v1091 = vunpack.c.h.b16 %v246
  %v1092 = vunpack.c.l.b16 %v247
  %v1093 = vunpack.c.l.b16 %v248
  %v1094 = vunpack.c.h.b16 %v248
  %v1095 = vunpack.c.l.b16 %v249
  %v1096 = vunpack.c.l.b16 %v250
  %v1097 = vunpack.c.h.b16 %v250
  %v1098 = vunpack.c.l.b16 %v251
  %v1099 = vunpack.c.l.b16 %v252
  %v1100 = vunpack.c.h.b16 %v252
  %v1101 = vunpack.c.l.b16 %v253
  %v1102 = vunpack.c.l.b16 %v254
  %v1103 = vunpack.c.h.b16 %v254
  %v1104 = vunpack.c.l.b16 %v255
  %v1105 = vunpack.c.l.b16 %v256
  %v1106 = vunpack.c.h.b16 %v256
  %v1107 = vunpack.c.l.b16 %v257
  %v1108 = vunpack.c.l.b16 %v258
  %v1109 = vunpack.c.h.b16 %v258
  %v1110 = vunpack.c.l.b16 %v259
  %v1111 = vunpack.c.l.b16 %v260
  %v1112 = vunpack.c.h.b16 %v260
  %v1113 = vunpack.c.l.b16 %v261
  %v1114 = vunpack.c.l.b16 %v262
  %v1115 = vunpack.c.h.b16 %v262
  %v1116 = vunpack.c.l.b16 %v263
  %v1117 = vunpack.c.l.b16 %v264
  %v1118 = vunpack.c.h.b16 %v264
  %v1119 = vunpack.c.l.b16 %v265
  %v1120 = vunpack.c.l.b16 %v266
  %v1121 = vunpack.c.h.b16 %v266
  %v1122 = vunpack.c.l.b16 %v267
  %v1123 = vunpack.c.l.b16 %v268
  %v1124 = vunpack.c.h.b16 %v268
  %v1125 = vunpack.c.l.b16 %v269
  %v1126 = vunpack.c.l.b16 %v270
  %v1127 = vunpack.c.h.b16 %v270
  %v1128 = vunpack.c.l.b16 %v271
  %v1129 = vunpack.c.l.b16 %v272
  %v1130 = vunpack.c.h.b16 %v272
  %v1131 = vunpack.c.l.b16 %v273
  %v1132 = vunpack.c.l.b16 %v274
  %v1133 = vunpack.c.h.b16 %v274
  %v1134 = vunpack.c.l.b16 %v275
  %v1135 = vunpack.c.l.b16 %v276
  %v1136 = vunpack.c.h.b16 %v276
  %v1137 = vunpack.c.l.b16 %v277
  %v1138 = vunpack.c.l.b16 %v278
  %v1139 = vunpack.c.h.b16 %v278
  %v1140 = vunpack.c.l.b16 %v279
  %v1141 = vunpack.c.l.b16 %v280
  %v1142 = vunpack.c.h.b16 %v280
  %v1143 = vunpack.c.l.b16 %v281
  %v1144 = vunpack.c.l.b16 %v282
  %v1145 = vunpack.c.h.b16 %v282
  %v1146 = vunpack.c.l.b16 %v283
  %v1147 = vunpack.c.l.b16 %v284
  %v1148 = vunpack.c.h.b16 %v284
  %v1149 = vunpack.c.l.b16 %v285
  %v1150 = vunpack.c.l.b16 %v286
  %v1151 = vunpack.c.h.b16 %v286
  %v1152 = vunpack.c.l.b16 %v287
  %v1153 = vunpack.c.l.b16 %v288
  %v1154 = vunpack.c.h.b16 %v288
  %v1155 = vunpack.c.l.b16 %v289
  %v1156 = vunpack.c.l.b16 %v290
  %v1157 = vunpack.c.h.b16 %v290
  %v1158 = vunpack.c.l.b16 %v291
  %v1159 = vunpack.c.l.b16 %v292
  %v1160 = vunpack.c.h.b16 %v292
  %v1161 = vunpack.c.l.b16 %v293
  %v1162 = vunpack.c.l.b16 %v294
  %v1163 = vunpack.c.h.b16 %v294
  %v1164 = vunpack.c.l.b16 %v295
  %v1165 = vunpack.c.l.b16 %v296
  %v1166 = vunpack.c.h.b16 %v296
  %v1167 = vunpack.c.l.b16 %v297
  %v1168 = vunpack.c.l.b16 %v298
  %v1169 = vunpack.c.h.b16 %v298
  %v1170 = vunpack.c.l.b16 %v299
  %v1171 = vunpack.c.l.b16 %v300
  %v1172 = vunpack.c.h.b16 %v300
  %v1173 = vunpack.c.l.b16 %v301
  %v1174 = vunpack.c.l.b16 %v302
  %v1175 = vunpack.c.h.b16 %v302
  %v1176 = vunpack.c.l.b16 %v303
  %v1177 = vunpack.c.l.b16 %v304
  %v1178 = vunpack.c.h.b16 %v304
  %v1179 = vunpack.c.l.b16 %v305
  %v1180 = vunpack.c.l.b16 %v306
  %v1181 = vunpack.c.h.b16 %v306
  %v1182 = vunpack.c.l.b16 %v307
  %v1183 = vunpack.c.l.b16 %v308
  %v1184 = vunpack.c.h.b16 %v308
  %v1185 = vunpack.c.l.b16 %v309
  %v1186 = vunpack.c.l.b16 %v310
  %v1187 = vunpack.c.h.b16 %v310
  %v1188 = vunpack.c.l.b16 %v311
  %v1189 = vunpack.c.l.b16 %v312
  %v1190 = vunpack.c.h.b16 %v312
  %v1191 = vunpack.c.l.b16 %v313
  %v1192 = vunpack.c.l.b16 %v314
  %v1193 = vunpack.c.h.b16 %v314
  %v1194 = vunpack.c.l.b16 %v315
  %v1195 = vunpack.c.l.b16 %v316
  %v1196 = vunpack.c.h.b16 %v316
  %v1197 = vunpack.c.l.b16 %v317
  %v1198 = vunpack.c.l.b16 %v318
  %v1199 = vunpack.c.h.b16 %v318
  %v1200 = vunpack.c.l.b16 %v319
  %v1201 = vunpack.c.l.b16 %v320
  %v1202 = vunpack.c.h.b16 %v320
  %v1203 = vunpack.c.l.b16 %v321
  %v1204 = vunpack.c.l.b16 %v322
  %v1205 = vunpack.c.h.b16 %v322
  %v1206 = vunpack.c.l.b16 %v323
  %v1207 = vunpack.c.l.b16 %v324
  %v1208 = vunpack.c.h.b16 %v324
  %v1209 = vunpack.c.l.b16 %v325
  %v1210 = vunpack.c.l.b16 %v326
  %v1211 = vunpack.c.h.b16 %v326
  %v1212 = vunpack.c.l.b16 %v327
  %v1213 = vunpack.c.l.b16 %v328
  %v1214 = vunpack.c.h.b16 %v328
  %v1215 = vunpack.c.l.b16 %v329
  %v1216 = vunpack.c.l.b16 %v330
  %v1217 = vunpack.c.h.b16 %v330
  %v1218 = vunpack.c.l.b16 %v331
  %v1219 = vunpack.c.l.b16 %v332
  %v1220 = vunpack.c.h.b16 %v332
  %v1221 = vunpack.c.l.b16 %v333
  %v1222 = vunpack.c.l.b16 %v334
  %v1223 = vunpack.c.h.b16 %v334
  %v1224 = vunpack.c.l.b16 %v335
  %v1225 = vunpack.c.l.b16 %v336
  %v1226 = vunpack.c.h.b16 %v336
  %v1227 = vunpack.c.l.b16 %v337
  %v1228 = vunpack.c.l.b16 %v338
  %v1229 = vunpack.c.h.b16 %v338
  %v1230 = vunpack.c.l.b16 %v339
  %v1231 = vunpack.c.l.b16 %v340
  %v1232 = vunpack.c.h.b16 %v340
  %v1233 = vunpack.c.l.b16 %v341
  %v1234 = vunpack.c.l.b16 %v342
  %v1235 = vunpack.c.h.b16 %v342
  %v1236 = vunpack.c.l.b16 %v343
  %v1237 = vunpack.c.l.b16 %v344
  %v1238 = vunpack.c.h.b16 %v344
  %v1239 = vunpack.c.l.b16 %v345
  %v1240 = vunpack.c.l.b16 %v346
  %v1241 = vunpack.c.h.b16 %v346
  %v1242 = vunpack.c.l.b16 %v347
  %v1243 = vunpack.c.l.b16 %v348
  %v1244 = vunpack.c.h.b16 %v348
  %v1245 = vunpack.c.l.b16 %v349
  %v1246 = vunpack.c.l.b16 %v350
  %v1247 = vunpack.c.h.b16 %v350
  %v1248 = vunpack.c.l.b16 %v351
  %v1249 = vunpack.c.l.b16 %v352
  %v1250 = vunpack.c.h.b16 %v352
  %v1251 = vunpack.c.l.b16 %v353
  %v1252 = vunpack.c.l.b16 %v354
  %v1253 = vunpack.c.h.b16 %v354
  %v1254 = vunpack.c.l.b16 %v355
  %v1255 = vunpack.c.l.b16 %v356
  %v1256 = vunpack.c.h.b16 %v356
  %v1257 = vunpack.c.l.b16 %v357
  %v1258 = vpack.c.b16 %v781, %v778
  %v1259 = vpack.c.b16 %v782, %v779
  %v1260 = vpack.c.b16 %v783, %v780
  %v1261 = vpack.c.b16 %v787, %v784
  %v1262 = vpack.c.b16 %v788, %v785
  %v1263 = vpack.c.b16 %v789, %v786
  %v1264 = vpack.c.b16 %v793, %v790
  %v1265 = vpack.c.b16 %v794, %v791
  %v1266 = vpack.c.b16 %v795, %v792
  %v1267 = vpack.c.b16 %v799, %v796
  %v1268 = vpack.c.b16 %v800, %v797
  %v1269 = vpack.c.b16 %v801, %v798
  %v1270 = vpack.c.b16 %v805, %v802
  %v1271 = vpack.c.b16 %v806, %v803
  %v1272 = vpack.c.b16 %v807, %v804
  %v1273 = vpack.c.b16 %v811, %v808
  %v1274 = vpack.c.b16 %v812, %v809
  %v1275 = vpack.c.b16 %v813, %v810
  %v1276 = vpack.c.b16 %v817, %v814
  %v1277 = vpack.c.b16 %v818, %v815
  %v1278 = vpack.c.b16 %v819, %v816
  %v1279 = vpack.c.b16 %v823, %v820
  %v1280 = vpack.c.b16 %v824, %v821
  %v1281 = vpack.c.b16 %v825, %v822
  %v1282 = vpack.c.b16 %v829, %v826
  %v1283 = vpack.c.b16 %v830, %v827
  %v1284 = vpack.c.b16 %v831, %v828
  %v1285 = vpack.c.b16 %v835, %v832
  %v1286 = vpack.c.b16 %v836, %v833
  %v1287 = vpack.c.b16 %v837, %v834
  %v1288 = vpack.c.b16 %v841, %v838
  %v1289 = vpack.c.b16 %v842, %v839
  %v1290 = vpack.c.b16 %v843, %v840
  %v1291 = vpack.c.b16 %v847, %v844
  %v1292 = vpack.c.b16 %v848, %v845
  %v1293 = vpack.c.b16 %v849, %v846
  %v1294 = vpack.c.b16 %v853, %v850
  %v1295 = vpack.c.b16 %v854, %v851
  %v1296 = vpack.c.b16 %v855, %v852
  %v1297 = vpack.c.b16 %v859, %v856
  %v1298 = vpack.c.b16 %v860, %v857
  %v1299 = vpack.c.b16 %v861, %v858
  %v1300 = vpack.c.b16 %v865, %v862
  %v1301 = vpack.c.b16 %v866, %v863
  %v1302 = vpack.c.b16 %v867, %v864
  %v1303 = vpack.c.b16 %v871, %v868
  %v1304 = vpack.c.b16 %v872, %v869
  %v1305 = vpack.c.b16 %v873, %v870
  %v1306 = vpack.c.b16 %v877, %v874
  %v1307 = vpack.c.b16 %v878, %v875
  %v1308 = vpack.c.b16 %v879, %v876
  %v1309 = vpack.c.b16 %v883, %v880
  %v1310 = vpack.c.b16 %v884, %v881
  %v1311 = vpack.c.b16 %v885, %v882
  %v1312 = vpack.c.b16 %v889, %v886
  %v1313 = vpack.c.b16 %v890, %v887
  %v1314 = vpack.c.b16 %v891, %v888
  %v1315 = vpack.c.b16 %v895, %v892
  %v1316 = vpack.c.b16 %v896, %v893
  %v1317 = vpack.c.b16 %v897, %v894
  %v1318 = vpack.c.b16 %v901, %v898
  %v1319 = vpack.c.b16 %v902, %v899
  %v1320 = vpack.c.b16 %v903, %v900
  %v1321 = vpack.c.b16 %v907, %v904
  %v1322 = vpack.c.b16 %v908, %v905
  %v1323 = vpack.c.b16 %v909, %v906
  %v1324 = vpack.c.b16 %v913, %v910
  %v1325 = vpack.c.b16 %v914, %v911
  %v1326 = vpack.c.b16 %v915, %v912
  %v1327 = vpack.c.b16 %v919, %v916
  %v1328 = vpack.c.b16 %v920, %v917
  %v1329 = vpack.c.b16 %v921, %v918
  %v1330 = vpack.c.b16 %v925, %v922
  %v1331 = vpack.c.b16 %v926, %v923
  %v1332 = vpack.c.b16 %v927, %v924
  %v1333 = vpack.c.b16 %v931, %v928
  %v1334 = vpack.c.b16 %v932, %v929
  %v1335 = vpack.c.b16 %v933, %v930
  %v1336 = vpack.c.b16 %v937, %v934
  %v1337 = vpack.c.b16 %v938, %v935
  %v1338 = vpack.c.b16 %v939, %v936
  %v1339 = vpack.c.b16 %v943, %v940
  %v1340 = vpack.c.b16 %v944, %v941
  %v1341 = vpack.c.b16 %v945, %v942
  %v1342 = vpack.c.b16 %v949, %v946
  %v1343 = vpack.c.b16 %v950, %v947
  %v1344 = vpack.c.b16 %v951, %v948
  %v1345 = vpack.c.b16 %v955, %v952
  %v1346 = vpack.c.b16 %v956, %v953
  %v1347 = vpack.c.b16 %v957, %v954
  %v1348 = vpack.c.b16 %v961, %v958
  %v1349 = vpack.c.b16 %v962, %v959
  %v1350 = vpack.c.b16 %v963, %v960
  %v1351 = vpack.c.b16 %v967, %v964
  %v1352 = vpack.c.b16 %v968, %v965
  %v1353 = vpack.c.b16 %v969, %v966
  %v1354 = vpack.c.b16 %v973, %v970
  %v1355 = vpack.c.b16 %v974, %v971
  %v1356 = vpack.c.b16 %v975, %v972
  %v1357 = vpack.c.b16 %v979, %v976
  %v1358 = vpack.c.b16 %v980, %v977
  %v1359 = vpack.c.b16 %v981, %v978
  %v1360 = vpack.c.b16 %v985, %v982
  %v1361 = vpack.c.b16 %v986, %v983
  %v1362 = vpack.c.b16 %v987, %v984
  %v1363 = vpack.c.b16 %v991, %v988
  %v1364 = vpack.c.b16 %v992, %v989
  %v1365 = vpack.c.b16 %v993, %v990
  %v1366 = vpack.c.b16 %v997, %v994
  %v1367 = vpack.c.b16 %v998, %v995
  %v1368 = vpack.c.b16 %v999, %v996
  %v1369 = vpack.c.b16 %v1003, %v1000
  %v1370 = vpack.c.b16 %v1004, %v1001
  %v1371 = vpack.c.b16 %v1005, %v1002
  %v1372 = vpack.c.b16 %v1009, %v1006
  %v1373 = vpack.c.b16 %v1010, %v1007
  %v1374 = vpack.c.b16 %v1011, %v1008
  %v1375 = vpack.c.b16 %v1015, %v1012
  %v1376 = vpack.c.b16 %v1016, %v1013
  %v1377 = vpack.c.b16 %v1017, %v1014
  %v1378 = vpack.c.b16 %v1021, %v1018
  %v1379 = vpack.c.b16 %v1022, %v1019
  %v1380 = vpack.c.b16 %v1023, %v1020
  %v1381 = vpack.c.b16 %v1027, %v1024
  %v1382 = vpack.c.b16 %v1028, %v1025
  %v1383 = vpack.c.b16 %v1029, %v1026
  %v1384 = vpack.c.b16 %v1033, %v1030
  %v1385 = vpack.c.b16 %v1034, %v1031
  %v1386 = vpack.c.b16 %v1035, %v1032
  %v1387 = vpack.c.b16 %v1039, %v1036
  %v1388 = vpack.c.b16 %v1040, %v1037
  %v1389 = vpack.c.b16 %v1041, %v1038
  %v1390 = vpack.c.b16 %v1045, %v1042
  %v1391 = vpack.c.b16 %v1046, %v1043
  %v1392 = vpack.c.b16 %v1047, %v1044
  %v1393 = vpack.c.b16 %v1051, %v1048
  %v1394 = vpack.c.b16 %v1052, %v1049
  %v1395 = vpack.c.b16 %v1053, %v1050
  %v1396 = vpack.c.b16 %v1057, %v1054
  %v1397 = vpack.c.b16 %v1058, %v1055
  %v1398 = vpack.c.b16 %v1059, %v1056
  %v1399 = vpack.c.b16 %v1063, %v1060
  %v1400 = vpack.c.b16 %v1064, %v1061
  %v1401 = vpack.c.b16 %v1065, %v1062
  %v1402 = vpack.c.b16 %v1069, %v1066
  %v1403 = vpack.c.b16 %v1070, %v1067
  %v1404 = vpack.c.b16 %v1071, %v1068
  %v1405 = vpack.c.b16 %v1075, %v1072
  %v1406 = vpack.c.b16 %v1076, %v1073
  %v1407 = vpack.c.b16 %v1077, %v1074
  %v1408 = vpack.c.b16 %v1081, %v1078
  %v1409 = vpack.c.b16 %v1082, %v1079
  %v1410 = vpack.c.b16 %v1083, %v1080
  %v1411 = vpack.c.b16 %v1087, %v1084
  %v1412 = vpack.c.b16 %v1088, %v1085
  %v1413 = vpack.c.b16 %v1089, %v1086
  %v1414 = vpack.c.b16 %v1093, %v1090
  %v1415 = vpack.c.b16 %v1094, %v1091
  %v1416 = vpack.c.b16 %v1095, %v1092
  %v1417 = vpack.c.b16 %v1099, %v1096
  %v1418 = vpack.c.b16 %v1100, %v1097
  %v1419 = vpack.c.b16 %v1101, %v1098
  %v1420 = vpack.c.b16 %v1105, %v1102
  %v1421 = vpack.c.b16 %v1106, %v1103
  %v1422 = vpack.c.b16 %v1107, %v1104
  %v1423 = vpack.c.b16 %v1111, %v1108
  %v1424 = vpack.c.b16 %v1112, %v1109
  %v1425 = vpack.c.b16 %v1113, %v1110
  %v1426 = vpack.c.b16 %v1117, %v1114
  %v1427 = vpack.c.b16 %v1118, %v1115
  %v1428 = vpack.c.b16 %v1119, %v1116
  %v1429 = vpack.c.b16 %v1123, %v1120
  %v1430 = vpack.c.b16 %v1124, %v1121
  %v1431 = vpack.c.b16 %v1125, %v1122
  %v1432 = vpack.c.b16 %v1129, %v1126
  %v1433 = vpack.c.b16 %v1130, %v1127
  %v1434 = vpack.c.b16 %v1131, %v1128
  %v1435 = vpack.c.b16 %v1135, %v1132
  %v1436 = vpack.c.b16 %v1136, %v1133
  %v1437 = vpack.c.b16 %v1137, %v1134
  %v1438 = vpack.c.b16 %v1141, %v1138
  %v1439 = vpack.c.b16 %v1142, %v1139
  %v1440 = vpack.c.b16 %v1143, %v1140
  %v1441 = vpack.c.b16 %v1147, %v1144
  %v1442 = vpack.c.b16 %v1148, %v1145
  %v1443 = vpack.c.b16 %v1149, %v1146
  %v1444 = vpack.c.b16 %v1153, %v1150
  %v1445 = vpack.c.b16 %v1154, %v1151
  %v1446 = vpack.c.b16 %v1155, %v1152
  %v1447 = vpack.c.b16 %v1159, %v1156
  %v1448 = vpack.c.b16 %v1160, %v1157
  %v1449 = vpack.c.b16 %v1161, %v1158
  %v1450 = vpack.c.b16 %v1165, %v1162
  %v1451 = vpack.c.b16 %v1166, %v1163
  %v1452 = vpack.c.b16 %v1167, %v1164
  %v1453 = vpack.c.b16 %v1171, %v1168
  %v1454 = vpack.c.b16 %v1172, %v1169
  %v1455 = vpack.c.b16 %v1173, %v1170
  %v1456 = vpack.c.b16 %v1177, %v1174
  %v1457 = vpack.c.b16 %v1178, %v1175
  %v1458 = vpack.c.b16 %v1179, %v1176
  %v1459 = vpack.c.b16 %v1183, %v1180
  %v1460 = vpack.c.b16 %v1184, %v1181
  %v1461 = vpack.c.b16 %v1185, %v1182
  %v1462 = vpack.c.b16 %v1189, %v1186
  %v1463 = vpack.c.b16 %v1190, %v1187
  %v1464 = vpack.c.b16 %v1191, %v1188
  %v1465 = vpack.c.b16 %v1195, %v1192
  %v1466 = vpack.c.b16 %v1196, %v1193
  %v1467 = vpack.c.b16 %v1197, %v1194
  %v1468 = vpack.c.b16 %v1201, %v1198
  %v1469 = vpack.c.b16 %v1202, %v1199
  %v1470 = vpack.c.b16 %v1203, %v1200
  %v1471 = vpack.c.b16 %v1207, %v1204
  %v1472 = vpack.c.b16 %v1208, %v1205
  %v1473 = vpack.c.b16 %v1209, %v1206
  %v1474 = vpack.c.b16 %v1213, %v1210
  %v1475 = vpack.c.b16 %v1214, %v1211
  %v1476 = vpack.c.b16 %v1215, %v1212
  %v1477 = vpack.c.b16 %v1219, %v1216
  %v1478 = vpack.c.b16 %v1220, %v1217
  %v1479 = vpack.c.b16 %v1221, %v1218
  %v1480 = vpack.c.b16 %v1225, %v1222
  %v1481 = vpack.c.b16 %v1226, %v1223
  %v1482 = vpack.c.b16 %v1227, %v1224
  %v1483 = vpack.c.b16 %v1231, %v1228
  %v1484 = vpack.c.b16 %v1232, %v1229
  %v1485 = vpack.c.b16 %v1233, %v1230
  %v1486 = vpack.c.b16 %v1237, %v1234
  %v1487 = vpack.c.b16 %v1238, %v1235
  %v1488 = vpack.c.b16 %v1239, %v1236
  %v1489 = vpack.c.b16 %v1243, %v1240
  %v1490 = vpack.c.b16 %v1244, %v1241
  %v1491 = vpack.c.b16 %v1245, %v1242
  %v1492 = vpack.c.b16 %v1249, %v1246
  %v1493 = vpack.c.b16 %v1250, %v1247
  %v1494 = vpack.c.b16 %v1251, %v1248
  %v1495 = vpack.c.b16 %v1255, %v1252
  %v1496 = vpack.c.b16 %v1256, %v1253
  %v1497 = vpack.c.b16 %v1257, %v1254
  %1738 = vmatprep.subr.bf16.mxu0 %v1259
  %1739 = vmatpush1.bf16.msra.mxu0 %v1258
  %1740 = vmatprep.subr.bf16.mxu0 %v1262
  %1741 = vmatpush1.bf16.msra.mxu0 %v1261
  %1742 = vmatprep.subr.bf16.mxu0 %v1265
  %1743 = vmatpush1.bf16.msra.mxu0 %v1264
  %1744 = vmatprep.subr.bf16.mxu0 %v1268
  %1745 = vmatpush1.bf16.msra.mxu0 %v1267
  %1746 = vmatprep.subr.bf16.mxu0 %v1271
  %1747 = vmatpush1.bf16.msra.mxu0 %v1270
  %1748 = vmatprep.subr.bf16.mxu0 %v1274
  %1749 = vmatpush1.bf16.msra.mxu0 %v1273
  %1750 = vmatprep.subr.bf16.mxu0 %v1277
  %1751 = vmatpush1.bf16.msra.mxu0 %v1276
  %1752 = vmatprep.subr.bf16.mxu0 %v1280
  %1753 = vmatpush1.bf16.msra.mxu0 %v1279
  %1754 = vmatprep.subr.bf16.mxu0 %v1283
  %1755 = vmatpush1.bf16.msra.mxu0 %v1282
  %1756 = vmatprep.subr.bf16.mxu0 %v1286
  %1757 = vmatpush1.bf16.msra.mxu0 %v1285
  %1758 = vmatprep.subr.bf16.mxu0 %v1289
  %1759 = vmatpush1.bf16.msra.mxu0 %v1288
  %1760 = vmatprep.subr.bf16.mxu0 %v1292
  %1761 = vmatpush1.bf16.msra.mxu0 %v1291
  %1762 = vmatprep.subr.bf16.mxu0 %v1295
  %1763 = vmatpush1.bf16.msra.mxu0 %v1294
  %1764 = vmatprep.subr.bf16.mxu0 %v1298
  %1765 = vmatpush1.bf16.msra.mxu0 %v1297
  %1766 = vmatprep.subr.bf16.mxu0 %v1301
  %1767 = vmatpush1.bf16.msra.mxu0 %v1300
  %1768 = vmatprep.subr.bf16.mxu0 %v1304
  %1769 = vmatpush1.bf16.msra.mxu0 %v1303
  %1770 = vmatprep.mubr.bf16.mxu0 %v419
  %1771 = vmatmul.mubr.bf16.gmra.mrb[0].mxu0 %v418
  %v1772 = vpop.f32.mrb[0].mxu0
  %v1773 = vadd.f32 0.0, %v1772
  %v1774 = vpop.f32.mrb[0].mxu0
  %v1775 = vadd.f32 0.0, %v1774
  %v1776 = vpop.f32.mrb[0].mxu0
  %v1777 = vadd.f32 0.0, %v1776
  %v1778 = vpop.f32.mrb[0].mxu0
  %v1779 = vadd.f32 0.0, %v1778
  %1780 = vmatprep.mubr.bf16.mxu0 %v429
  %1781 = vmatmul.mubr.bf16.gmra.mrb[0].mxu0 %v428
  %v1782 = vpop.f32.mrb[0].mxu0
  %v1783 = vadd.f32 0.0, %v1782
  %v1784 = vpop.f32.mrb[0].mxu0
  %v1785 = vadd.f32 0.0, %v1784
  %v1786 = vpop.f32.mrb[0].mxu0
  %v1787 = vadd.f32 0.0, %v1786
  %v1788 = vpop.f32.mrb[0].mxu0
  %v1789 = vadd.f32 0.0, %v1788
  %1790 = vdwg.mxu0
  %1791 = vmatprep.subr.bf16.mxu0 %v1307
  %1792 = vmatpush1.bf16.msra.mxu0 %v1306
  %1793 = vmatprep.subr.bf16.mxu0 %v1310
  %1794 = vmatpush1.bf16.msra.mxu0 %v1309
  %1795 = vmatprep.subr.bf16.mxu0 %v1313
  %1796 = vmatpush1.bf16.msra.mxu0 %v1312
  %1797 = vmatprep.subr.bf16.mxu0 %v1316
  %1798 = vmatpush1.bf16.msra.mxu0 %v1315
  %1799 = vmatprep.subr.bf16.mxu0 %v1319
  %1800 = vmatpush1.bf16.msra.mxu0 %v1318
  %1801 = vmatprep.subr.bf16.mxu0 %v1322
  %1802 = vmatpush1.bf16.msra.mxu0 %v1321
  %1803 = vmatprep.subr.bf16.mxu0 %v1325
  %1804 = vmatpush1.bf16.msra.mxu0 %v1324
  %1805 = vmatprep.subr.bf16.mxu0 %v1328
  %1806 = vmatpush1.bf16.msra.mxu0 %v1327
  %1807 = vmatprep.subr.bf16.mxu0 %v1331
  %1808 = vmatpush1.bf16.msra.mxu0 %v1330
  %1809 = vmatprep.subr.bf16.mxu0 %v1334
  %1810 = vmatpush1.bf16.msra.mxu0 %v1333
  %1811 = vmatprep.subr.bf16.mxu0 %v1337
  %1812 = vmatpush1.bf16.msra.mxu0 %v1336
  %1813 = vmatprep.subr.bf16.mxu0 %v1340
  %1814 = vmatpush1.bf16.msra.mxu0 %v1339
  %1815 = vmatprep.subr.bf16.mxu0 %v1343
  %1816 = vmatpush1.bf16.msra.mxu0 %v1342
  %1817 = vmatprep.subr.bf16.mxu0 %v1346
  %1818 = vmatpush1.bf16.msra.mxu0 %v1345
  %1819 = vmatprep.subr.bf16.mxu0 %v1349
  %1820 = vmatpush1.bf16.msra.mxu0 %v1348
  %1821 = vmatprep.subr.bf16.mxu0 %v1352
  %1822 = vmatpush1.bf16.msra.mxu0 %v1351
  %1823 = vmatprep.mubr.bf16.mxu0 %v421
  %1824 = vmatmul.mubr.bf16.gmra.mrb[0].mxu0 %v420
  %v1825 = vpop.f32.mrb[0].mxu0
  %v1826 = vadd.f32 %v1773, %v1825
  %v1827 = vpop.f32.mrb[0].mxu0
  %v1828 = vadd.f32 %v1775, %v1827
  %v1829 = vpop.f32.mrb[0].mxu0
  %v1830 = vadd.f32 %v1777, %v1829
  %v1831 = vpop.f32.mrb[0].mxu0
  %v1832 = vadd.f32 %v1779, %v1831
  %1833 = vmatprep.mubr.bf16.mxu0 %v431
  %1834 = vmatmul.mubr.bf16.gmra.mrb[0].mxu0 %v430
  %v1835 = vpop.f32.mrb[0].mxu0
  %v1836 = vadd.f32 %v1783, %v1835
  %v1837 = vpop.f32.mrb[0].mxu0
  %v1838 = vadd.f32 %v1785, %v1837
  %v1839 = vpop.f32.mrb[0].mxu0
  %v1840 = vadd.f32 %v1787, %v1839
  %v1841 = vpop.f32.mrb[0].mxu0
  %v1842 = vadd.f32 %v1789, %v1841
  %1843 = vdwg.mxu0
  %1844 = vmatprep.subr.bf16.mxu0 %v1355
  %1845 = vmatpush1.bf16.msra.mxu0 %v1354
  %1846 = vmatprep.subr.bf16.mxu0 %v1358
  %1847 = vmatpush1.bf16.msra.mxu0 %v1357
  %1848 = vmatprep.subr.bf16.mxu0 %v1361
  %1849 = vmatpush1.bf16.msra.mxu0 %v1360
  %1850 = vmatprep.subr.bf16.mxu0 %v1364
  %1851 = vmatpush1.bf16.msra.mxu0 %v1363
  %1852 = vmatprep.subr.bf16.mxu0 %v1367
  %1853 = vmatpush1.bf16.msra.mxu0 %v1366
  %1854 = vmatprep.subr.bf16.mxu0 %v1370
  %1855 = vmatpush1.bf16.msra.mxu0 %v1369
  %1856 = vmatprep.subr.bf16.mxu0 %v1373
  %1857 = vmatpush1.bf16.msra.mxu0 %v1372
  %1858 = vmatprep.subr.bf16.mxu0 %v1376
  %1859 = vmatpush1.bf16.msra.mxu0 %v1375
  %1860 = vmatprep.subr.bf16.mxu0 %v1379
  %1861 = vmatpush1.bf16.msra.mxu0 %v1378
  %1862 = vmatprep.subr.bf16.mxu0 %v1382
  %1863 = vmatpush1.bf16.msra.mxu0 %v1381
  %1864 = vmatprep.subr.bf16.mxu0 %v1385
  %1865 = vmatpush1.bf16.msra.mxu0 %v1384
  %1866 = vmatprep.subr.bf16.mxu0 %v1388
  %1867 = vmatpush1.bf16.msra.mxu0 %v1387
  %1868 = vmatprep.subr.bf16.mxu0 %v1391
  %1869 = vmatpush1.bf16.msra.mxu0 %v1390
  %1870 = vmatprep.subr.bf16.mxu0 %v1394
  %1871 = vmatpush1.bf16.msra.mxu0 %v1393
  %1872 = vmatprep.subr.bf16.mxu0 %v1397
  %1873 = vmatpush1.bf16.msra.mxu0 %v1396
  %1874 = vmatprep.subr.bf16.mxu0 %v1400
  %1875 = vmatpush1.bf16.msra.mxu0 %v1399
  %1876 = vmatprep.mubr.bf16.mxu0 %v423
  %1877 = vmatmul.mubr.bf16.gmra.mrb[0].mxu0 %v422
  %v1878 = vpop.f32.mrb[0].mxu0
  %v1879 = vadd.f32 %v1826, %v1878
  %v1880 = vpop.f32.mrb[0].mxu0
  %v1881 = vadd.f32 %v1828, %v1880
  %v1882 = vpop.f32.mrb[0].mxu0
  %v1883 = vadd.f32 %v1830, %v1882
  %v1884 = vpop.f32.mrb[0].mxu0
  %v1885 = vadd.f32 %v1832, %v1884
  %1886 = vmatprep.mubr.bf16.mxu0 %v433
  %1887 = vmatmul.mubr.bf16.gmra.mrb[0].mxu0 %v432
  %v1888 = vpop.f32.mrb[0].mxu0
  %v1889 = vadd.f32 %v1836, %v1888
  %v1890 = vpop.f32.mrb[0].mxu0
  %v1891 = vadd.f32 %v1838, %v1890
  %v1892 = vpop.f32.mrb[0].mxu0
  %v1893 = vadd.f32 %v1840, %v1892
  %v1894 = vpop.f32.mrb[0].mxu0
  %v1895 = vadd.f32 %v1842, %v1894
  %1896 = vdwg.mxu0
  %1897 = vmatprep.subr.bf16.mxu0 %v1403
  %1898 = vmatpush1.bf16.msra.mxu0 %v1402
  %1899 = vmatprep.subr.bf16.mxu0 %v1406
  %1900 = vmatpush1.bf16.msra.mxu0 %v1405
  %1901 = vmatprep.subr.bf16.mxu0 %v1409
  %1902 = vmatpush1.bf16.msra.mxu0 %v1408
  %1903 = vmatprep.subr.bf16.mxu0 %v1412
  %1904 = vmatpush1.bf16.msra.mxu0 %v1411
  %1905 = vmatprep.subr.bf16.mxu0 %v1415
  %1906 = vmatpush1.bf16.msra.mxu0 %v1414
  %1907 = vmatprep.subr.bf16.mxu0 %v1418
  %1908 = vmatpush1.bf16.msra.mxu0 %v1417
  %1909 = vmatprep.subr.bf16.mxu0 %v1421
  %1910 = vmatpush1.bf16.msra.mxu0 %v1420
  %1911 = vmatprep.subr.bf16.mxu0 %v1424
  %1912 = vmatpush1.bf16.msra.mxu0 %v1423
  %1913 = vmatprep.subr.bf16.mxu0 %v1427
  %1914 = vmatpush1.bf16.msra.mxu0 %v1426
  %1915 = vmatprep.subr.bf16.mxu0 %v1430
  %1916 = vmatpush1.bf16.msra.mxu0 %v1429
  %1917 = vmatprep.subr.bf16.mxu0 %v1433
  %1918 = vmatpush1.bf16.msra.mxu0 %v1432
  %1919 = vmatprep.subr.bf16.mxu0 %v1436
  %1920 = vmatpush1.bf16.msra.mxu0 %v1435
  %1921 = vmatprep.subr.bf16.mxu0 %v1439
  %1922 = vmatpush1.bf16.msra.mxu0 %v1438
  %1923 = vmatprep.subr.bf16.mxu0 %v1442
  %1924 = vmatpush1.bf16.msra.mxu0 %v1441
  %1925 = vmatprep.subr.bf16.mxu0 %v1445
  %1926 = vmatpush1.bf16.msra.mxu0 %v1444
  %1927 = vmatprep.subr.bf16.mxu0 %v1448
  %1928 = vmatpush1.bf16.msra.mxu0 %v1447
  %1929 = vmatprep.mubr.bf16.mxu0 %v425
  %1930 = vmatmul.mubr.bf16.gmra.mrb[0].mxu0 %v424
  %v1931 = vpop.f32.mrb[0].mxu0
  %v1932 = vadd.f32 %v1879, %v1931
  %v1933 = vpop.f32.mrb[0].mxu0
  %v1934 = vadd.f32 %v1881, %v1933
  %v1935 = vpop.f32.mrb[0].mxu0
  %v1936 = vadd.f32 %v1883, %v1935
  %v1937 = vpop.f32.mrb[0].mxu0
  %v1938 = vadd.f32 %v1885, %v1937
  %1939 = vmatprep.mubr.bf16.mxu0 %v435
  %1940 = vmatmul.mubr.bf16.gmra.mrb[0].mxu0 %v434
  %v1941 = vpop.f32.mrb[0].mxu0
  %v1942 = vadd.f32 %v1889, %v1941
  %v1943 = vpop.f32.mrb[0].mxu0
  %v1944 = vadd.f32 %v1891, %v1943
  %v1945 = vpop.f32.mrb[0].mxu0
  %v1946 = vadd.f32 %v1893, %v1945
  %v1947 = vpop.f32.mrb[0].mxu0
  %v1948 = vadd.f32 %v1895, %v1947
  %1949 = vdwg.mxu0
  %1950 = vmatprep.subr.bf16.mxu0 %v1451
  %1951 = vmatpush1.bf16.msra.mxu0 %v1450
  %1952 = vmatprep.subr.bf16.mxu0 %v1454
  %1953 = vmatpush1.bf16.msra.mxu0 %v1453
  %1954 = vmatprep.subr.bf16.mxu0 %v1457
  %1955 = vmatpush1.bf16.msra.mxu0 %v1456
  %1956 = vmatprep.subr.bf16.mxu0 %v1460
  %1957 = vmatpush1.bf16.msra.mxu0 %v1459
  %1958 = vmatprep.subr.bf16.mxu0 %v1463
  %1959 = vmatpush1.bf16.msra.mxu0 %v1462
  %1960 = vmatprep.subr.bf16.mxu0 %v1466
  %1961 = vmatpush1.bf16.msra.mxu0 %v1465
  %1962 = vmatprep.subr.bf16.mxu0 %v1469
  %1963 = vmatpush1.bf16.msra.mxu0 %v1468
  %1964 = vmatprep.subr.bf16.mxu0 %v1472
  %1965 = vmatpush1.bf16.msra.mxu0 %v1471
  %1966 = vmatprep.subr.bf16.mxu0 %v1475
  %1967 = vmatpush1.bf16.msra.mxu0 %v1474
  %1968 = vmatprep.subr.bf16.mxu0 %v1478
  %1969 = vmatpush1.bf16.msra.mxu0 %v1477
  %1970 = vmatprep.subr.bf16.mxu0 %v1481
  %1971 = vmatpush1.bf16.msra.mxu0 %v1480
  %1972 = vmatprep.subr.bf16.mxu0 %v1484
  %1973 = vmatpush1.bf16.msra.mxu0 %v1483
  %1974 = vmatprep.subr.bf16.mxu0 %v1487
  %1975 = vmatpush1.bf16.msra.mxu0 %v1486
  %1976 = vmatprep.subr.bf16.mxu0 %v1490
  %1977 = vmatpush1.bf16.msra.mxu0 %v1489
  %1978 = vmatprep.subr.bf16.mxu0 %v1493
  %1979 = vmatpush1.bf16.msra.mxu0 %v1492
  %1980 = vmatprep.subr.bf16.mxu0 %v1496
  %1981 = vmatpush1.bf16.msra.mxu0 %v1495
  %1982 = vmatprep.mubr.bf16.mxu0 %v427
  %1983 = vmatmul.mubr.bf16.gmra.mrb[0].mxu0 %v426
  %v1984 = vpop.f32.mrb[0].mxu0
  %v1985 = vadd.f32 %v1932, %v1984
  %v1986 = vpop.f32.mrb[0].mxu0
  %v1987 = vadd.f32 %v1934, %v1986
  %v1988 = vpop.f32.mrb[0].mxu0
  %v1989 = vadd.f32 %v1936, %v1988
  %v1990 = vpop.f32.mrb[0].mxu0
  %v1991 = vadd.f32 %v1938, %v1990
  %1992 = vmatprep.mubr.bf16.mxu0 %v437
  %1993 = vmatmul.mubr.bf16.gmra.mrb[0].mxu0 %v436
  %v1994 = vpop.f32.mrb[0].mxu0
  %v1995 = vadd.f32 %v1942, %v1994
  %v1996 = vpop.f32.mrb[0].mxu0
  %v1997 = vadd.f32 %v1944, %v1996
  %v1998 = vpop.f32.mrb[0].mxu0
  %v1999 = vadd.f32 %v1946, %v1998
  %v2000 = vpop.f32.mrb[0].mxu0
  %v2001 = vadd.f32 %v1948, %v2000
  %2002 = vdwg.mxu0
  %2003 = vmatprep.subr.bf16.mxu0 0
  %2004 = vmatpush1.bf16.msra.mxu0 %v1260
  %2005 = vmatprep.subr.bf16.mxu0 0
  %2006 = vmatpush1.bf16.msra.mxu0 %v1263
  %2007 = vmatprep.subr.bf16.mxu0 0
  %2008 = vmatpush1.bf16.msra.mxu0 %v1266
  %2009 = vmatprep.subr.bf16.mxu0 0
  %2010 = vmatpush1.bf16.msra.mxu0 %v1269
  %2011 = vmatprep.subr.bf16.mxu0 0
  %2012 = vmatpush1.bf16.msra.mxu0 %v1272
  %2013 = vmatprep.subr.bf16.mxu0 0
  %2014 = vmatpush1.bf16.msra.mxu0 %v1275
  %2015 = vmatprep.subr.bf16.mxu0 0
  %2016 = vmatpush1.bf16.msra.mxu0 %v1278
  %2017 = vmatprep.subr.bf16.mxu0 0
  %2018 = vmatpush1.bf16.msra.mxu0 %v1281
  %2019 = vmatprep.subr.bf16.mxu0 0
  %2020 = vmatpush1.bf16.msra.mxu0 %v1284
  %2021 = vmatprep.subr.bf16.mxu0 0
  %2022 = vmatpush1.bf16.msra.mxu0 %v1287
  %2023 = vmatprep.subr.bf16.mxu0 0
  %2024 = vmatpush1.bf16.msra.mxu0 %v1290
  %2025 = vmatprep.subr.bf16.mxu0 0
  %2026 = vmatpush1.bf16.msra.mxu0 %v1293
  %2027 = vmatprep.subr.bf16.mxu0 0
  %2028 = vmatpush1.bf16.msra.mxu0 %v1296
  %2029 = vmatprep.subr.bf16.mxu0 0
  %2030 = vmatpush1.bf16.msra.mxu0 %v1299
  %2031 = vmatprep.subr.bf16.mxu0 0
  %2032 = vmatpush1.bf16.msra.mxu0 %v1302
  %2033 = vmatprep.subr.bf16.mxu0 0
  %2034 = vmatpush1.bf16.msra.mxu0 %v1305
  %2035 = vmatprep.mubr.bf16.mxu0 %v419
  %2036 = vmatmul.mubr.bf16.gmra.mrb[0].mxu0 %v418
  %v2037 = vpop.f32.mrb[0].mxu0
  %v2038 = vadd.f32 0.0, %v2037
  %v2039 = vpop.f32.mrb[0].mxu0
  %v2040 = vpop.f32.mrb[0].mxu0
  %v2041 = vadd.f32 0.0, %v2040
  %v2042 = vpop.f32.mrb[0].mxu0
  %2043 = vmatprep.mubr.bf16.mxu0 %v429
  %2044 = vmatmul.mubr.bf16.gmra.mrb[0].mxu0 %v428
  %v2045 = vpop.f32.mrb[0].mxu0
  %v2046 = vadd.f32 0.0, %v2045
  %v2047 = vpop.f32.mrb[0].mxu0
  %v2048 = vpop.f32.mrb[0].mxu0
  %v2049 = vadd.f32 0.0, %v2048
  %v2050 = vpop.f32.mrb[0].mxu0
  %2051 = vdwg.mxu0
  %2052 = vmatprep.subr.bf16.mxu0 0
  %2053 = vmatpush1.bf16.msra.mxu0 %v1308
  %2054 = vmatprep.subr.bf16.mxu0 0
  %2055 = vmatpush1.bf16.msra.mxu0 %v1311
  %2056 = vmatprep.subr.bf16.mxu0 0
  %2057 = vmatpush1.bf16.msra.mxu0 %v1314
  %2058 = vmatprep.subr.bf16.mxu0 0
  %2059 = vmatpush1.bf16.msra.mxu0 %v1317
  %2060 = vmatprep.subr.bf16.mxu0 0
  %2061 = vmatpush1.bf16.msra.mxu0 %v1320
  %2062 = vmatprep.subr.bf16.mxu0 0
  %2063 = vmatpush1.bf16.msra.mxu0 %v1323
  %2064 = vmatprep.subr.bf16.mxu0 0
  %2065 = vmatpush1.bf16.msra.mxu0 %v1326
  %2066 = vmatprep.subr.bf16.mxu0 0
  %2067 = vmatpush1.bf16.msra.mxu0 %v1329
  %2068 = vmatprep.subr.bf16.mxu0 0
  %2069 = vmatpush1.bf16.msra.mxu0 %v1332
  %2070 = vmatprep.subr.bf16.mxu0 0
  %2071 = vmatpush1.bf16.msra.mxu0 %v1335
  %2072 = vmatprep.subr.bf16.mxu0 0
  %2073 = vmatpush1.bf16.msra.mxu0 %v1338
  %2074 = vmatprep.subr.bf16.mxu0 0
  %2075 = vmatpush1.bf16.msra.mxu0 %v1341
  %2076 = vmatprep.subr.bf16.mxu0 0
  %2077 = vmatpush1.bf16.msra.mxu0 %v1344
  %2078 = vmatprep.subr.bf16.mxu0 0
  %2079 = vmatpush1.bf16.msra.mxu0 %v1347
  %2080 = vmatprep.subr.bf16.mxu0 0
  %2081 = vmatpush1.bf16.msra.mxu0 %v1350
  %2082 = vmatprep.subr.bf16.mxu0 0
  %2083 = vmatpush1.bf16.msra.mxu0 %v1353
  %2084 = vmatprep.mubr.bf16.mxu0 %v421
  %2085 = vmatmul.mubr.bf16.gmra.mrb[0].mxu0 %v420
  %v2086 = vpop.f32.mrb[0].mxu0
  %v2087 = vadd.f32 %v2038, %v2086
  %v2088 = vpop.f32.mrb[0].mxu0
  %v2089 = vpop.f32.mrb[0].mxu0
  %v2090 = vadd.f32 %v2041, %v2089
  %v2091 = vpop.f32.mrb[0].mxu0
  %2092 = vmatprep.mubr.bf16.mxu0 %v431
  %2093 = vmatmul.mubr.bf16.gmra.mrb[0].mxu0 %v430
  %v2094 = vpop.f32.mrb[0].mxu0
  %v2095 = vadd.f32 %v2046, %v2094
  %v2096 = vpop.f32.mrb[0].mxu0
  %v2097 = vpop.f32.mrb[0].mxu0
  %v2098 = vadd.f32 %v2049, %v2097
  %v2099 = vpop.f32.mrb[0].mxu0
  %2100 = vdwg.mxu0
  %2101 = vmatprep.subr.bf16.mxu0 0
  %2102 = vmatpush1.bf16.msra.mxu0 %v1356
  %2103 = vmatprep.subr.bf16.mxu0 0
  %2104 = vmatpush1.bf16.msra.mxu0 %v1359
  %2105 = vmatprep.subr.bf16.mxu0 0
  %2106 = vmatpush1.bf16.msra.mxu0 %v1362
  %2107 = vmatprep.subr.bf16.mxu0 0
  %2108 = vmatpush1.bf16.msra.mxu0 %v1365
  %2109 = vmatprep.subr.bf16.mxu0 0
  %2110 = vmatpush1.bf16.msra.mxu0 %v1368
  %2111 = vmatprep.subr.bf16.mxu0 0
  %2112 = vmatpush1.bf16.msra.mxu0 %v1371
  %2113 = vmatprep.subr.bf16.mxu0 0
  %2114 = vmatpush1.bf16.msra.mxu0 %v1374
  %2115 = vmatprep.subr.bf16.mxu0 0
  %2116 = vmatpush1.bf16.msra.mxu0 %v1377
  %2117 = vmatprep.subr.bf16.mxu0 0
  %2118 = vmatpush1.bf16.msra.mxu0 %v1380
  %2119 = vmatprep.subr.bf16.mxu0 0
  %2120 = vmatpush1.bf16.msra.mxu0 %v1383
  %2121 = vmatprep.subr.bf16.mxu0 0
  %2122 = vmatpush1.bf16.msra.mxu0 %v1386
  %2123 = vmatprep.subr.bf16.mxu0 0
  %2124 = vmatpush1.bf16.msra.mxu0 %v1389
  %2125 = vmatprep.subr.bf16.mxu0 0
  %2126 = vmatpush1.bf16.msra.mxu0 %v1392
  %2127 = vmatprep.subr.bf16.mxu0 0
  %2128 = vmatpush1.bf16.msra.mxu0 %v1395
  %2129 = vmatprep.subr.bf16.mxu0 0
  %2130 = vmatpush1.bf16.msra.mxu0 %v1398
  %2131 = vmatprep.subr.bf16.mxu0 0
  %2132 = vmatpush1.bf16.msra.mxu0 %v1401
  %2133 = vmatprep.mubr.bf16.mxu0 %v423
  %2134 = vmatmul.mubr.bf16.gmra.mrb[0].mxu0 %v422
  %v2135 = vpop.f32.mrb[0].mxu0
  %v2136 = vadd.f32 %v2087, %v2135
  %v2137 = vpop.f32.mrb[0].mxu0
  %v2138 = vpop.f32.mrb[0].mxu0
  %v2139 = vadd.f32 %v2090, %v2138
  %v2140 = vpop.f32.mrb[0].mxu0
  %2141 = vmatprep.mubr.bf16.mxu0 %v433
  %2142 = vmatmul.mubr.bf16.gmra.mrb[0].mxu0 %v432
  %v2143 = vpop.f32.mrb[0].mxu0
  %v2144 = vadd.f32 %v2095, %v2143
  %v2145 = vpop.f32.mrb[0].mxu0
  %v2146 = vpop.f32.mrb[0].mxu0
  %v2147 = vadd.f32 %v2098, %v2146
  %v2148 = vpop.f32.mrb[0].mxu0
  %2149 = vdwg.mxu0
  %2150 = vmatprep.subr.bf16.mxu0 0
  %2151 = vmatpush1.bf16.msra.mxu0 %v1404
  %2152 = vmatprep.subr.bf16.mxu0 0
  %2153 = vmatpush1.bf16.msra.mxu0 %v1407
  %2154 = vmatprep.subr.bf16.mxu0 0
  %2155 = vmatpush1.bf16.msra.mxu0 %v1410
  %2156 = vmatprep.subr.bf16.mxu0 0
  %2157 = vmatpush1.bf16.msra.mxu0 %v1413
  %2158 = vmatprep.subr.bf16.mxu0 0
  %2159 = vmatpush1.bf16.msra.mxu0 %v1416
  %2160 = vmatprep.subr.bf16.mxu0 0
  %2161 = vmatpush1.bf16.msra.mxu0 %v1419
  %2162 = vmatprep.subr.bf16.mxu0 0
  %2163 = vmatpush1.bf16.msra.mxu0 %v1422
  %2164 = vmatprep.subr.bf16.mxu0 0
  %2165 = vmatpush1.bf16.msra.mxu0 %v1425
  %2166 = vmatprep.subr.bf16.mxu0 0
  %2167 = vmatpush1.bf16.msra.mxu0 %v1428
  %2168 = vmatprep.subr.bf16.mxu0 0
  %2169 = vmatpush1.bf16.msra.mxu0 %v1431
  %2170 = vmatprep.subr.bf16.mxu0 0
  %2171 = vmatpush1.bf16.msra.mxu0 %v1434
  %2172 = vmatprep.subr.bf16.mxu0 0
  %2173 = vmatpush1.bf16.msra.mxu0 %v1437
  %2174 = vmatprep.subr.bf16.mxu0 0
  %2175 = vmatpush1.bf16.msra.mxu0 %v1440
  %2176 = vmatprep.subr.bf16.mxu0 0
  %2177 = vmatpush1.bf16.msra.mxu0 %v1443
  %2178 = vmatprep.subr.bf16.mxu0 0
  %2179 = vmatpush1.bf16.msra.mxu0 %v1446
  %2180 = vmatprep.subr.bf16.mxu0 0
  %2181 = vmatpush1.bf16.msra.mxu0 %v1449
  %2182 = vmatprep.mubr.bf16.mxu0 %v425
  %2183 = vmatmul.mubr.bf16.gmra.mrb[0].mxu0 %v424
  %v2184 = vpop.f32.mrb[0].mxu0
  %v2185 = vadd.f32 %v2136, %v2184
  %v2186 = vpop.f32.mrb[0].mxu0
  %v2187 = vpop.f32.mrb[0].mxu0
  %v2188 = vadd.f32 %v2139, %v2187
  %v2189 = vpop.f32.mrb[0].mxu0
  %2190 = vmatprep.mubr.bf16.mxu0 %v435
  %2191 = vmatmul.mubr.bf16.gmra.mrb[0].mxu0 %v434
  %v2192 = vpop.f32.mrb[0].mxu0
  %v2193 = vadd.f32 %v2144, %v2192
  %v2194 = vpop.f32.mrb[0].mxu0
  %v2195 = vpop.f32.mrb[0].mxu0
  %v2196 = vadd.f32 %v2147, %v2195
  %v2197 = vpop.f32.mrb[0].mxu0
  %2198 = vdwg.mxu0
  %2199 = vmatprep.subr.bf16.mxu0 0
  %2200 = vmatpush1.bf16.msra.mxu0 %v1452
  %2201 = vmatprep.subr.bf16.mxu0 0
  %2202 = vmatpush1.bf16.msra.mxu0 %v1455
  %2203 = vmatprep.subr.bf16.mxu0 0
  %2204 = vmatpush1.bf16.msra.mxu0 %v1458
  %2205 = vmatprep.subr.bf16.mxu0 0
  %2206 = vmatpush1.bf16.msra.mxu0 %v1461
  %2207 = vmatprep.subr.bf16.mxu0 0
  %2208 = vmatpush1.bf16.msra.mxu0 %v1464
  %2209 = vmatprep.subr.bf16.mxu0 0
  %2210 = vmatpush1.bf16.msra.mxu0 %v1467
  %2211 = vmatprep.subr.bf16.mxu0 0
  %2212 = vmatpush1.bf16.msra.mxu0 %v1470
  %2213 = vmatprep.subr.bf16.mxu0 0
  %2214 = vmatpush1.bf16.msra.mxu0 %v1473
  %2215 = vmatprep.subr.bf16.mxu0 0
  %2216 = vmatpush1.bf16.msra.mxu0 %v1476
  %2217 = vmatprep.subr.bf16.mxu0 0
  %2218 = vmatpush1.bf16.msra.mxu0 %v1479
  %2219 = vmatprep.subr.bf16.mxu0 0
  %2220 = vmatpush1.bf16.msra.mxu0 %v1482
  %2221 = vmatprep.subr.bf16.mxu0 0
  %2222 = vmatpush1.bf16.msra.mxu0 %v1485
  %2223 = vmatprep.subr.bf16.mxu0 0
  %2224 = vmatpush1.bf16.msra.mxu0 %v1488
  %2225 = vmatprep.subr.bf16.mxu0 0
  %2226 = vmatpush1.bf16.msra.mxu0 %v1491
  %2227 = vmatprep.subr.bf16.mxu0 0
  %2228 = vmatpush1.bf16.msra.mxu0 %v1494
  %2229 = vmatprep.subr.bf16.mxu0 0
  %2230 = vmatpush1.bf16.msra.mxu0 %v1497
  %2231 = vmatprep.mubr.bf16.mxu0 %v427
  %2232 = vmatmul.mubr.bf16.gmra.mrb[0].mxu0 %v426
  %v2233 = vpop.f32.mrb[0].mxu0
  %v2234 = vadd.f32 %v2185, %v2233
  %v2235 = vpop.f32.mrb[0].mxu0
  %v2236 = vpop.f32.mrb[0].mxu0
  %v2237 = vadd.f32 %v2188, %v2236
  %v2238 = vpop.f32.mrb[0].mxu0
  %2239 = vmatprep.mubr.bf16.mxu0 %v437
  %2240 = vmatmul.mubr.bf16.gmra.mrb[0].mxu0 %v436
  %v2241 = vpop.f32.mrb[0].mxu0
  %v2242 = vadd.f32 %v2193, %v2241
  %v2243 = vpop.f32.mrb[0].mxu0
  %v2244 = vpop.f32.mrb[0].mxu0
  %v2245 = vadd.f32 %v2196, %v2244
  %v2246 = vpop.f32.mrb[0].mxu0
  %2247 = vdwg.mxu0
  %v2248 = vld [vmem:[%s2] sm:$0x1]
  %v2250 = vlaneseq
  %v2251 = vshrl.u32 %v2250, 7
  %v2252 = vsub.s32 0, %v2251
  %v2253 = vrot.slane %v2248, %v2252
  %2255 = vst [vmem:[#allocation2] sm:$0xff] %v2253
  %2256 = vst [vmem:[#allocation2 + $0x8] sm:$0xff] %v2253
  %2257 = vst [vmem:[#allocation2 + $0x10] sm:$0xff] %v2253
  %2258 = vst [vmem:[#allocation2 + $0x18] sm:$0xff] %v2253
  %2259 = vst [vmem:[#allocation2 + $0x20] sm:$0xff] %v2253
  %2260 = vst [vmem:[#allocation2 + $0x28] sm:$0x3] %v2253
  %v2261 = vld [vmem:[%s3] sm:$0xff]
  %v2262 = vld [vmem:[%s3 + $0x8] sm:$0xff]
  %v2263 = vld [vmem:[%s3 + $0x10] sm:$0xff]
  %v2264 = vld [vmem:[%s3 + $0x18] sm:$0xff]
  %2266 = vset.pattern.permute.xlu0 0
  %2267 = vperm.xlu0 %2266, %v2261
  %v2268 = vpop.permute.xlu0 %2267
  %2271 = vset.pattern.permute.xlu0 0
  %2272 = vperm.xlu0 %2271, %v2262
  %v2273 = vpop.permute.xlu0 %2272
  %2276 = vset.pattern.permute.xlu0 0
  %2277 = vperm.xlu0 %2276, %v2263
  %v2278 = vpop.permute.xlu0 %2277
  %2281 = vset.pattern.permute.xlu0 0
  %2282 = vperm.xlu0 %2281, %v2264
  %v2283 = vpop.permute.xlu0 %2282
  %v2285 = vmul.f32 %v1985, %v2268
  %v2286 = vmul.f32 %v1989, %v2273
  %v2287 = vmul.f32 %v1995, %v2278
  %v2288 = vmul.f32 %v1999, %v2283
  %v2289 = vld [vmem:[#allocation2 + $0xa] sm:$0xff]
  %v2290 = vld [vmem:[#allocation2 + $0x12] sm:$0xff]
  %v2291 = vld [vmem:[#allocation2 + $0x1a] sm:$0xff]
  %v2292 = vld [vmem:[#allocation2 + $0x22] sm:$0xff]
  %v2293 = vadd.f32 %v2289, %v2285
  %v2294 = vadd.f32 %v2290, %v2286
  %v2295 = vadd.f32 %v2291, %v2287
  %v2296 = vadd.f32 %v2292, %v2288
  %vm2297 = vcmask 293888
  %2298 = vst.msk [vmem:[#allocation2 + $0xa] sm:$0xff] %vm2297, %v2293
  %2299 = vst.msk [vmem:[#allocation2 + $0x12] sm:$0xff] %vm2297, %v2294
  %2300 = vst.msk [vmem:[#allocation2 + $0x1a] sm:$0xff] %vm2297, %v2295
  %2301 = vst.msk [vmem:[#allocation2 + $0x22] sm:$0xff] %vm2297, %v2296
  %v2302 = vld [vmem:[%s3] sm:$0xff]
  %v2303 = vld [vmem:[%s3 + $0x8] sm:$0xff]
  %v2304 = vld [vmem:[%s3 + $0x10] sm:$0xff]
  %v2305 = vld [vmem:[%s3 + $0x18] sm:$0xff]
  %2307 = vset.pattern.permute.xlu0 1
  %2308 = vperm.xlu0 %2307, %v2302
  %v2309 = vpop.permute.xlu0 %2308
  %2312 = vset.pattern.permute.xlu0 1
  %2313 = vperm.xlu0 %2312, %v2303
  %v2314 = vpop.permute.xlu0 %2313
  %2317 = vset.pattern.permute.xlu0 1
  %2318 = vperm.xlu0 %2317, %v2304
  %v2319 = vpop.permute.xlu0 %2318
  %2322 = vset.pattern.permute.xlu0 1
  %2323 = vperm.xlu0 %2322, %v2305
  %v2324 = vpop.permute.xlu0 %2323
  %v2326 = vmul.f32 %v1985, %v2309
  %v2327 = vmul.f32 %v1989, %v2314
  %v2328 = vmul.f32 %v1995, %v2319
  %v2329 = vmul.f32 %v1999, %v2324
  %v2330 = vld [vmem:[#allocation2 + $0x9] sm:$0xff]
  %v2331 = vld [vmem:[#allocation2 + $0x11] sm:$0xff]
  %v2332 = vld [vmem:[#allocation2 + $0x19] sm:$0xff]
  %v2333 = vld [vmem:[#allocation2 + $0x21] sm:$0xff]
  %2338 = vrot.lane.b32.xlu0 %v2326, 92
  %v2339 = vpop.permute.xlu0 %2338
  %2340 = vrot.lane.b32.xlu0 %v2327, 92
  %v2341 = vpop.permute.xlu0 %2340
  %2342 = vrot.lane.b32.xlu0 %v2328, 92
  %v2343 = vpop.permute.xlu0 %2342
  %2344 = vrot.lane.b32.xlu0 %v2329, 92
  %v2345 = vpop.permute.xlu0 %2344
  %v2350 = vadd.f32 %v2330, %v2339
  %v2351 = vadd.f32 %v2331, %v2341
  %v2352 = vadd.f32 %v2332, %v2343
  %v2353 = vadd.f32 %v2333, %v2345
  %2354 = vst.msk [vmem:[#allocation2 + $0x9] sm:$0xff] %vm2297, %v2350
  %2355 = vst.msk [vmem:[#allocation2 + $0x11] sm:$0xff] %vm2297, %v2351
  %2356 = vst.msk [vmem:[#allocation2 + $0x19] sm:$0xff] %vm2297, %v2352
  %2357 = vst.msk [vmem:[#allocation2 + $0x21] sm:$0xff] %vm2297, %v2353
  %v2358 = vld [vmem:[%s3] sm:$0xff]
  %v2359 = vld [vmem:[%s3 + $0x8] sm:$0xff]
  %v2360 = vld [vmem:[%s3 + $0x10] sm:$0xff]
  %v2361 = vld [vmem:[%s3 + $0x18] sm:$0xff]
  %2363 = vset.pattern.permute.xlu0 2
  %2364 = vperm.xlu0 %2363, %v2358
  %v2365 = vpop.permute.xlu0 %2364
  %2368 = vset.pattern.permute.xlu0 2
  %2369 = vperm.xlu0 %2368, %v2359
  %v2370 = vpop.permute.xlu0 %2369
  %2373 = vset.pattern.permute.xlu0 2
  %2374 = vperm.xlu0 %2373, %v2360
  %v2375 = vpop.permute.xlu0 %2374
  %2378 = vset.pattern.permute.xlu0 2
  %2379 = vperm.xlu0 %2378, %v2361
  %v2380 = vpop.permute.xlu0 %2379
  %v2382 = vmul.f32 %v1985, %v2365
  %v2383 = vmul.f32 %v1989, %v2370
  %v2384 = vmul.f32 %v1995, %v2375
  %v2385 = vmul.f32 %v1999, %v2380
  %v2386 = vld [vmem:[#allocation2 + $0x8] sm:$0xff]
  %v2387 = vld [vmem:[#allocation2 + $0x10] sm:$0xff]
  %v2388 = vld [vmem:[#allocation2 + $0x18] sm:$0xff]
  %v2389 = vld [vmem:[#allocation2 + $0x20] sm:$0xff]
  %2394 = vrot.lane.b32.xlu0 %v2382, 56
  %v2395 = vpop.permute.xlu0 %2394
  %2396 = vrot.lane.b32.xlu0 %v2383, 56
  %v2397 = vpop.permute.xlu0 %2396
  %2398 = vrot.lane.b32.xlu0 %v2384, 56
  %v2399 = vpop.permute.xlu0 %2398
  %2400 = vrot.lane.b32.xlu0 %v2385, 56
  %v2401 = vpop.permute.xlu0 %2400
  %v2406 = vadd.f32 %v2386, %v2395
  %v2407 = vadd.f32 %v2387, %v2397
  %v2408 = vadd.f32 %v2388, %v2399
  %v2409 = vadd.f32 %v2389, %v2401
  %2410 = vst.msk [vmem:[#allocation2 + $0x8] sm:$0xff] %vm2297, %v2406
  %2411 = vst.msk [vmem:[#allocation2 + $0x10] sm:$0xff] %vm2297, %v2407
  %2412 = vst.msk [vmem:[#allocation2 + $0x18] sm:$0xff] %vm2297, %v2408
  %2413 = vst.msk [vmem:[#allocation2 + $0x20] sm:$0xff] %vm2297, %v2409
  %v2414 = vld [vmem:[%s3] sm:$0xff]
  %v2415 = vld [vmem:[%s3 + $0x8] sm:$0xff]
  %v2416 = vld [vmem:[%s3 + $0x10] sm:$0xff]
  %v2417 = vld [vmem:[%s3 + $0x18] sm:$0xff]
  %2419 = vset.pattern.permute.xlu0 3
  %2420 = vperm.xlu0 %2419, %v2414
  %v2421 = vpop.permute.xlu0 %2420
  %2424 = vset.pattern.permute.xlu0 3
  %2425 = vperm.xlu0 %2424, %v2415
  %v2426 = vpop.permute.xlu0 %2425
  %2429 = vset.pattern.permute.xlu0 3
  %2430 = vperm.xlu0 %2429, %v2416
  %v2431 = vpop.permute.xlu0 %2430
  %2434 = vset.pattern.permute.xlu0 3
  %2435 = vperm.xlu0 %2434, %v2417
  %v2436 = vpop.permute.xlu0 %2435
  %v2438 = vmul.f32 %v1987, %v2421
  %v2439 = vmul.f32 %v1991, %v2426
  %v2440 = vmul.f32 %v1997, %v2431
  %v2441 = vmul.f32 %v2001, %v2436
  %v2442 = vld [vmem:[#allocation2 + $0x6] sm:$0xff]
  %v2443 = vld [vmem:[#allocation2 + $0xe] sm:$0xff]
  %v2444 = vld [vmem:[#allocation2 + $0x16] sm:$0xff]
  %v2445 = vld [vmem:[#allocation2 + $0x1e] sm:$0xff]
  %v2446 = vadd.f32 %v2442, %v2438
  %v2447 = vadd.f32 %v2443, %v2439
  %v2448 = vadd.f32 %v2444, %v2440
  %v2449 = vadd.f32 %v2445, %v2441
  %2450 = vst.msk [vmem:[#allocation2 + $0x6] sm:$0xff] %vm2297, %v2446
  %2451 = vst.msk [vmem:[#allocation2 + $0xe] sm:$0xff] %vm2297, %v2447
  %2452 = vst.msk [vmem:[#allocation2 + $0x16] sm:$0xff] %vm2297, %v2448
  %2453 = vst.msk [vmem:[#allocation2 + $0x1e] sm:$0xff] %vm2297, %v2449
  %v2454 = vld [vmem:[#allocation2 + $0x5] sm:$0xff]
  %v2455 = vld [vmem:[#allocation2 + $0xd] sm:$0xff]
  %v2456 = vld [vmem:[#allocation2 + $0x15] sm:$0xff]
  %v2457 = vld [vmem:[#allocation2 + $0x1d] sm:$0xff]
  %2462 = vrot.lane.b32.xlu0 %v1987, 92
  %v2463 = vpop.permute.xlu0 %2462
  %2464 = vrot.lane.b32.xlu0 %v1991, 92
  %v2465 = vpop.permute.xlu0 %2464
  %2466 = vrot.lane.b32.xlu0 %v1997, 92
  %v2467 = vpop.permute.xlu0 %2466
  %2468 = vrot.lane.b32.xlu0 %v2001, 92
  %v2469 = vpop.permute.xlu0 %2468
  %v2474 = vadd.f32 %v2454, %v2463
  %v2475 = vadd.f32 %v2455, %v2465
  %v2476 = vadd.f32 %v2456, %v2467
  %v2477 = vadd.f32 %v2457, %v2469
  %2478 = vst.msk [vmem:[#allocation2 + $0x5] sm:$0xff] %vm2297, %v2474
  %2479 = vst.msk [vmem:[#allocation2 + $0xd] sm:$0xff] %vm2297, %v2475
  %2480 = vst.msk [vmem:[#allocation2 + $0x15] sm:$0xff] %vm2297, %v2476
  %2481 = vst.msk [vmem:[#allocation2 + $0x1d] sm:$0xff] %vm2297, %v2477
  %v2482 = vld [vmem:[%s3] sm:$0xff]
  %v2483 = vld [vmem:[%s3 + $0x8] sm:$0xff]
  %v2484 = vld [vmem:[%s3 + $0x10] sm:$0xff]
  %v2485 = vld [vmem:[%s3 + $0x18] sm:$0xff]
  %2487 = vset.pattern.permute.xlu0 5
  %2488 = vperm.xlu0 %2487, %v2482
  %v2489 = vpop.permute.xlu0 %2488
  %2492 = vset.pattern.permute.xlu0 5
  %2493 = vperm.xlu0 %2492, %v2483
  %v2494 = vpop.permute.xlu0 %2493
  %2497 = vset.pattern.permute.xlu0 5
  %2498 = vperm.xlu0 %2497, %v2484
  %v2499 = vpop.permute.xlu0 %2498
  %2502 = vset.pattern.permute.xlu0 5
  %2503 = vperm.xlu0 %2502, %v2485
  %v2504 = vpop.permute.xlu0 %2503
  %v2506 = vmul.f32 %v1987, %v2489
  %v2507 = vmul.f32 %v1991, %v2494
  %v2508 = vmul.f32 %v1997, %v2499
  %v2509 = vmul.f32 %v2001, %v2504
  %v2510 = vld [vmem:[#allocation2 + $0x4] sm:$0xff]
  %v2511 = vld [vmem:[#allocation2 + $0xc] sm:$0xff]
  %v2512 = vld [vmem:[#allocation2 + $0x14] sm:$0xff]
  %v2513 = vld [vmem:[#allocation2 + $0x1c] sm:$0xff]
  %2518 = vrot.lane.b32.xlu0 %v2506, 56
  %v2519 = vpop.permute.xlu0 %2518
  %2520 = vrot.lane.b32.xlu0 %v2507, 56
  %v2521 = vpop.permute.xlu0 %2520
  %2522 = vrot.lane.b32.xlu0 %v2508, 56
  %v2523 = vpop.permute.xlu0 %2522
  %2524 = vrot.lane.b32.xlu0 %v2509, 56
  %v2525 = vpop.permute.xlu0 %2524
  %v2530 = vadd.f32 %v2510, %v2519
  %v2531 = vadd.f32 %v2511, %v2521
  %v2532 = vadd.f32 %v2512, %v2523
  %v2533 = vadd.f32 %v2513, %v2525
  %2534 = vst.msk [vmem:[#allocation2 + $0x4] sm:$0xff] %vm2297, %v2530
  %2535 = vst.msk [vmem:[#allocation2 + $0xc] sm:$0xff] %vm2297, %v2531
  %2536 = vst.msk [vmem:[#allocation2 + $0x14] sm:$0xff] %vm2297, %v2532
  %2537 = vst.msk [vmem:[#allocation2 + $0x1c] sm:$0xff] %vm2297, %v2533
  %v2538 = vld [vmem:[%s3] sm:$0xff]
  %v2539 = vld [vmem:[%s3 + $0x8] sm:$0xff]
  %v2540 = vld [vmem:[%s3 + $0x10] sm:$0xff]
  %v2541 = vld [vmem:[%s3 + $0x18] sm:$0xff]
  %2543 = vset.pattern.permute.xlu0 6
  %2544 = vperm.xlu0 %2543, %v2538
  %v2545 = vpop.permute.xlu0 %2544
  %2548 = vset.pattern.permute.xlu0 6
  %2549 = vperm.xlu0 %2548, %v2539
  %v2550 = vpop.permute.xlu0 %2549
  %2553 = vset.pattern.permute.xlu0 6
  %2554 = vperm.xlu0 %2553, %v2540
  %v2555 = vpop.permute.xlu0 %2554
  %2558 = vset.pattern.permute.xlu0 6
  %2559 = vperm.xlu0 %2558, %v2541
  %v2560 = vpop.permute.xlu0 %2559
  %v2562 = vmul.f32 %v2234, %v2545
  %v2563 = vmul.f32 %v2237, %v2550
  %v2564 = vmul.f32 %v2242, %v2555
  %v2565 = vmul.f32 %v2245, %v2560
  %v2566 = vld [vmem:[#allocation2 + $0x2] sm:$0xff]
  %v2567 = vld [vmem:[#allocation2 + $0xa] sm:$0xff]
  %v2568 = vld [vmem:[#allocation2 + $0x12] sm:$0xff]
  %v2569 = vld [vmem:[#allocation2 + $0x1a] sm:$0xff]
  %v2570 = vadd.f32 %v2566, %v2562
  %v2571 = vadd.f32 %v2567, %v2563
  %v2572 = vadd.f32 %v2568, %v2564
  %v2573 = vadd.f32 %v2569, %v2565
  %2574 = vst.msk [vmem:[#allocation2 + $0x2] sm:$0xff] %vm2297, %v2570
  %2575 = vst.msk [vmem:[#allocation2 + $0xa] sm:$0xff] %vm2297, %v2571
  %2576 = vst.msk [vmem:[#allocation2 + $0x12] sm:$0xff] %vm2297, %v2572
  %2577 = vst.msk [vmem:[#allocation2 + $0x1a] sm:$0xff] %vm2297, %v2573
  %v2578 = vld [vmem:[%s3] sm:$0xff]
  %v2579 = vld [vmem:[%s3 + $0x8] sm:$0xff]
  %v2580 = vld [vmem:[%s3 + $0x10] sm:$0xff]
  %v2581 = vld [vmem:[%s3 + $0x18] sm:$0xff]
  %2583 = vset.pattern.permute.xlu0 7
  %2584 = vperm.xlu0 %2583, %v2578
  %v2585 = vpop.permute.xlu0 %2584
  %2588 = vset.pattern.permute.xlu0 7
  %2589 = vperm.xlu0 %2588, %v2579
  %v2590 = vpop.permute.xlu0 %2589
  %2593 = vset.pattern.permute.xlu0 7
  %2594 = vperm.xlu0 %2593, %v2580
  %v2595 = vpop.permute.xlu0 %2594
  %2598 = vset.pattern.permute.xlu0 7
  %2599 = vperm.xlu0 %2598, %v2581
  %v2600 = vpop.permute.xlu0 %2599
  %v2602 = vmul.f32 %v2234, %v2585
  %v2603 = vmul.f32 %v2237, %v2590
  %v2604 = vmul.f32 %v2242, %v2595
  %v2605 = vmul.f32 %v2245, %v2600
  %v2606 = vld [vmem:[#allocation2 + $0x1] sm:$0xff]
  %v2607 = vld [vmem:[#allocation2 + $0x9] sm:$0xff]
  %v2608 = vld [vmem:[#allocation2 + $0x11] sm:$0xff]
  %v2609 = vld [vmem:[#allocation2 + $0x19] sm:$0xff]
  %2614 = vrot.lane.b32.xlu0 %v2602, 92
  %v2615 = vpop.permute.xlu0 %2614
  %2616 = vrot.lane.b32.xlu0 %v2603, 92
  %v2617 = vpop.permute.xlu0 %2616
  %2618 = vrot.lane.b32.xlu0 %v2604, 92
  %v2619 = vpop.permute.xlu0 %2618
  %2620 = vrot.lane.b32.xlu0 %v2605, 92
  %v2621 = vpop.permute.xlu0 %2620
  %v2626 = vadd.f32 %v2606, %v2615
  %v2627 = vadd.f32 %v2607, %v2617
  %v2628 = vadd.f32 %v2608, %v2619
  %v2629 = vadd.f32 %v2609, %v2621
  %2630 = vst.msk [vmem:[#allocation2 + $0x1] sm:$0xff] %vm2297, %v2626
  %2631 = vst.msk [vmem:[#allocation2 + $0x9] sm:$0xff] %vm2297, %v2627
  %2632 = vst.msk [vmem:[#allocation2 + $0x11] sm:$0xff] %vm2297, %v2628
  %2633 = vst.msk [vmem:[#allocation2 + $0x19] sm:$0xff] %vm2297, %v2629
  %v2634 = vld [vmem:[%s3] sm:$0xff]
  %v2635 = vld [vmem:[%s3 + $0x8] sm:$0xff]
  %v2636 = vld [vmem:[%s3 + $0x10] sm:$0xff]
  %v2637 = vld [vmem:[%s3 + $0x18] sm:$0xff]
  %2639 = vset.pattern.permute.xlu0 8
  %2640 = vperm.xlu0 %2639, %v2634
  %v2641 = vpop.permute.xlu0 %2640
  %2644 = vset.pattern.permute.xlu0 8
  %2645 = vperm.xlu0 %2644, %v2635
  %v2646 = vpop.permute.xlu0 %2645
  %2649 = vset.pattern.permute.xlu0 8
  %2650 = vperm.xlu0 %2649, %v2636
  %v2651 = vpop.permute.xlu0 %2650
  %2654 = vset.pattern.permute.xlu0 8
  %2655 = vperm.xlu0 %2654, %v2637
  %v2656 = vpop.permute.xlu0 %2655
  %v2658 = vmul.f32 %v2234, %v2641
  %v2659 = vmul.f32 %v2237, %v2646
  %v2660 = vmul.f32 %v2242, %v2651
  %v2661 = vmul.f32 %v2245, %v2656
  %v2662 = vld [vmem:[#allocation2] sm:$0xff]
  %v2663 = vld [vmem:[#allocation2 + $0x8] sm:$0xff]
  %v2664 = vld [vmem:[#allocation2 + $0x10] sm:$0xff]
  %v2665 = vld [vmem:[#allocation2 + $0x18] sm:$0xff]
  %2670 = vrot.lane.b32.xlu0 %v2658, 56
  %v2671 = vpop.permute.xlu0 %2670
  %2672 = vrot.lane.b32.xlu0 %v2659, 56
  %v2673 = vpop.permute.xlu0 %2672
  %2674 = vrot.lane.b32.xlu0 %v2660, 56
  %v2675 = vpop.permute.xlu0 %2674
  %2676 = vrot.lane.b32.xlu0 %v2661, 56
  %v2677 = vpop.permute.xlu0 %2676
  %v2682 = vadd.f32 %v2662, %v2671
  %v2683 = vadd.f32 %v2663, %v2673
  %v2684 = vadd.f32 %v2664, %v2675
  %v2685 = vadd.f32 %v2665, %v2677
  %2686 = vst.msk [vmem:[#allocation2] sm:$0xff] %vm2297, %v2682
  %2687 = vst.msk [vmem:[#allocation2 + $0x8] sm:$0xff] %vm2297, %v2683
  %2688 = vst.msk [vmem:[#allocation2 + $0x10] sm:$0xff] %vm2297, %v2684
  %2689 = vst.msk [vmem:[#allocation2 + $0x18] sm:$0xff] %vm2297, %v2685
  %v2690 = vld [vmem:[#allocation2 + $0x5] sm:$0xff]
  %v2691 = vld [vmem:[#allocation2 + $0xd] sm:$0xff]
  %v2692 = vld [vmem:[#allocation2 + $0x15] sm:$0xff]
  %v2693 = vld [vmem:[#allocation2 + $0x1d] sm:$0xff]
  %2694 = vst [vmem:[%s4] sm:$0xff] %v2690
  %2695 = vst [vmem:[%s4 + $0x8] sm:$0xff] %v2691
  %2696 = vst [vmem:[%s4 + $0x10] sm:$0xff] %v2692
  %2697 = vst [vmem:[%s4 + $0x18] sm:$0xff] %v2693
  // Predicated region
  $region18: #{ssd_heads.1} parent=0 // pred_check
    _
  $region19: #{ssd_heads.1} parent=0 // pred_check_branch
    %2699 = sbr.rel (0) target = $region21
  $region20: #{ssd_heads.1} parent=0 // pred_region
    _
  $region21: #{ssd_heads.1} parent=0 // pred_fallthru
    _
  // Predicated region
  $region22: #{ssd_heads.1} parent=0 // pred_check
    _
  $region23: #{ssd_heads.1} parent=0 // pred_check_branch
    %2701 = sbr.rel (0) target = $region25
  $region24: #{ssd_heads.1} parent=0 // pred_region
    _
  $region25: #{ssd_heads.1} parent=0 // pred_fallthru
    _

</llo_original>
